<compile_context>
chip_gen: v7x
topology: tpu7x:2x2x1
jax: 0.10.0
libtpu: 0.0.40
codegen_flags: <defaults>
</compile_context>

<pallas_src>
import jax
import jax.numpy as jnp
from jax.experimental import pallas as pl
from jax.experimental.pallas import tpu as pltpu


def _round_up(v, m):
    return (v + m - 1) // m * m


def conv2d_pallas(x_nchw, w, b):
    """Valid 2D conv, stride 1.  x: [N,C,H,W], w: [CO,C,KH,KW], b: [CO]."""
    N, C, H, W = x_nchw.shape
    CO, _, KH, KW = w.shape
    OH, OW = H - KH + 1, W - KW + 1
    HW = H * W
    K = C * KH * KW                      # 75
    K_pad = _round_up(K, 16)             # 80: sublane-only pad (bf16 packs 16)
    M_len = (OH - 1) * W + OW            # span of flat indices oh*W + ow used

    # ---- kernel (closes over the static shape parameters) ------------------
    def kernel(x_ref, w_ref, b_ref, o_ref, a_ref):
        # x_ref: [C, H*W]     f32   one image, rows flattened (VMEM resident)
        # w_ref: [CO, K_pad]  bf16  resident across grid steps
        # b_ref: [CO, 1]      f32   resident
        # o_ref: [CO, OH, OW] f32   one image of the NCHW output
        # a_ref: [K_pad, M_len] bf16 scratch -- in-VMEM patch (im2col) tile
        if K_pad > K:                    # zero pad rows (guards against 0*NaN)
            a_ref[K:, :] = jnp.zeros((K_pad - K, M_len), jnp.bfloat16)
        # Build the patch matrix from shifted lane slices of the image:
        #   A[(kh*KW + kw)*C + c, oh*W + ow] = x[c, oh+kh, ow+kw]
        for kh in range(KH):
            for kw in range(KW):
                t = kh * KW + kw
                d = kh * W + kw
                a_ref[t * C:(t + 1) * C, :] = (
                    x_ref[:, d:d + M_len].astype(jnp.bfloat16))
        # Single GEMM over K on the MXU, f32 accumulation; bias folded in.
        acc = jnp.dot(w_ref[...], a_ref[...],
                      preferred_element_type=jnp.float32) + b_ref[...]
        # Compact the stride-W flat rows into dense NCHW output rows
        # (static loop; OH is small at the module's sizes).
        for oh in range(OH):
            o_ref[:, oh, :] = acc[:, oh * W:oh * W + OW]

    # ---- operands: no HBM im2col; the reshape of x moves no data -----------
    xf = x_nchw.reshape(N, C, HW)
    w_mat = jnp.zeros((CO, K_pad), jnp.bfloat16)
    w_mat = w_mat.at[:, :K].set(
        w.transpose(0, 2, 3, 1).reshape(CO, K).astype(jnp.bfloat16))
    bias_col = b.astype(jnp.float32).reshape(CO, 1)

    # ---- VMEM budget from the actual per-step footprint (+ headroom) -------
    x_blk = C * HW * 4                      # double-buffered input block
    o_blk = CO * OH * OW * 4                # double-buffered output block
    a_scr = K_pad * M_len * 2               # patch scratch (bf16)
    acc_tmp = CO * M_len * 4                # f32 GEMM result temp
    const = CO * K_pad * 2 + CO * 4         # weights + bias
    footprint = 2 * (x_blk + o_blk) + a_scr + acc_tmp + 2 * const
    vmem_limit = int(min(max(footprint + 8 * 1024 * 1024, 16 * 1024 * 1024),
                         48 * 1024 * 1024))

    cost = pl.CostEstimate(
        flops=2 * N * OH * OW * K * CO,
        transcendentals=0,
        bytes_accessed=(N * C * HW * 4 + N * CO * OH * OW * 4
                        + CO * K_pad * 2 + CO * 4),
    )

    out = pl.pallas_call(
        kernel,
        out_shape=jax.ShapeDtypeStruct((N, CO, OH, OW), jnp.float32),
        grid_spec=pltpu.PrefetchScalarGridSpec(
            num_scalar_prefetch=0,
            grid=(N,),                                   # N>=2 -> both v7x TCs busy
            in_specs=[
                pl.BlockSpec((None, C, HW), lambda n: (n, 0, 0)),   # one image
                pl.BlockSpec((CO, K_pad), lambda n: (0, 0)),        # weights resident
                pl.BlockSpec((CO, 1), lambda n: (0, 0)),            # bias resident
            ],
            out_specs=pl.BlockSpec((None, CO, OH, OW),
                                   lambda n: (n, 0, 0, 0)),         # NCHW direct
            scratch_shapes=[pltpu.VMEM((K_pad, M_len), jnp.bfloat16)],
        ),
        compiler_params=pltpu.CompilerParams(
            dimension_semantics=("parallel",),
            vmem_limit_bytes=vmem_limit),
        cost_estimate=cost,
    )(xf, w_mat, bias_col)
    return out


def ssegnet_forward(x, params):
    """Pallas implementation of SSegNet.forward (the only defined layer: conv1)."""
    return conv2d_pallas(x, params["conv1_w"], params["conv1_b"])


def init_params(key):
    # nn.Conv2d(3, 16, 5): weight [16, 3, 5, 5], bias [16]
    kw, kb = jax.random.split(key)
    w = jax.random.normal(kw, (16, 3, 5, 5), jnp.float32) * 0.1
    b = jax.random.normal(kb, (16,), jnp.float32) * 0.1
    return {"conv1_w": w, "conv1_b": b}


if __name__ == "__main__":
    key = jax.random.PRNGKey(0)
    k_x, k_p = jax.random.split(key)

    # Small shapes consistent with the module (3-channel images).
    x = jax.random.normal(k_x, (2, 3, 16, 16), jnp.float32)
    params = init_params(k_p)

    fwd = jax.jit(ssegnet_forward)
    y = jax.block_until_ready(fwd(x, params))
    assert y.shape == (2, 16, 12, 12), y.shape

    # Tight reference: XLA conv on the same bf16-rounded operands (the kernel
    # multiplies bf16 x bf16 exactly and accumulates in f32 on the MXU).
    xb = x.astype(jnp.bfloat16).astype(jnp.float32)
    wb = params["conv1_w"].astype(jnp.bfloat16).astype(jnp.float32)
    y_ref = jax.lax.conv_general_dilated(
        xb, wb, window_strides=(1, 1), padding="VALID",
        dimension_numbers=("NCHW", "OIHW", "NCHW"),
        precision=jax.lax.Precision.HIGHEST,
    ) + params["conv1_b"][None, :, None, None]
    y_ref = jax.block_until_ready(y_ref)
    assert jnp.allclose(y, y_ref, atol=1e-4, rtol=1e-4), "mismatch vs bf16-rounded reference"

    # Loose sanity check vs the full-f32 reference (only bf16 input rounding differs).
    y_ref32 = jax.lax.conv_general_dilated(
        x, params["conv1_w"], window_strides=(1, 1), padding="VALID",
        dimension_numbers=("NCHW", "OIHW", "NCHW"),
        precision=jax.lax.Precision.HIGHEST,
    ) + params["conv1_b"][None, :, None, None]
    assert jnp.allclose(y, y_ref32, atol=5e-2, rtol=5e-2), "mismatch vs f32 reference"

    print("KERNEL_OK")
</pallas_src>

<mosaic_0001>
module attributes {stable_mosaic.version = 11 : i64} {
  func.func @kernel(%arg0: i32, %arg1: memref<1x3x256xf32, #tpu.memory_space<vmem>>, %arg2: memref<16x80xbf16, #tpu.memory_space<vmem>>, %arg3: memref<16x1xf32, #tpu.memory_space<vmem>>, %arg4: memref<1x16x12x12xf32, #tpu.memory_space<vmem>>, %arg5: memref<80x188xbf16, #tpu.memory_space<vmem>>) attributes {dimension_semantics = [#tpu.dimension_semantics<parallel>], iteration_bounds = array<i64: 2>, scalar_prefetch = 0 : i64, scratch_operands = 1 : i64, tpu.core_type = #tpu.core_type<tc>, window_params = [{transform_indices = @transform_0, window_bounds = array<i64: 1, 3, 256>}, {pipeline_mode = #tpu.pipeline_mode<synchronous>, transform_indices = @transform_1, window_bounds = array<i64: 16, 80>}, {pipeline_mode = #tpu.pipeline_mode<synchronous>, transform_indices = @transform_2, window_bounds = array<i64: 16, 1>}, {transform_indices = @transform_3, window_bounds = array<i64: 1, 16, 12, 12>}]} {
    %cst = arith.constant 0.000000e+00 : bf16
    %0 = vector.broadcast %cst : bf16 to vector<5x188xbf16>
    %c75 = arith.constant 75 : index
    %c0 = arith.constant 0 : index
    %1 = vector.load %arg5[%c75, %c0] : memref<80x188xbf16, #tpu.memory_space<vmem>>, vector<5x188xbf16>
    tpu.vector_store %arg5[%c75, %c0], %0 {strides = array<i32>} : memref<80x188xbf16, #tpu.memory_space<vmem>>, vector<5x188xbf16>,
    %c0_0 = arith.constant 0 : index
    %c0_1 = arith.constant 0 : index
    %c0_2 = arith.constant 0 : index
    %2 = vector.load %arg1[%c0_0, %c0_1, %c0_2] : memref<1x3x256xf32, #tpu.memory_space<vmem>>, vector<1x3x188xf32>
    %3 = vector.shape_cast %2 : vector<1x3x188xf32> to vector<3x188xf32>
    %4 = arith.truncf %3 : vector<3x188xf32> to vector<3x188xbf16>
    %c0_3 = arith.constant 0 : index
    %c0_4 = arith.constant 0 : index
    %5 = vector.load %arg5[%c0_3, %c0_4] : memref<80x188xbf16, #tpu.memory_space<vmem>>, vector<3x188xbf16>
    tpu.vector_store %arg5[%c0_3, %c0_4], %4 {strides = array<i32>} : memref<80x188xbf16, #tpu.memory_space<vmem>>, vector<3x188xbf16>,
    %c0_5 = arith.constant 0 : index
    %c0_6 = arith.constant 0 : index
    %c1 = arith.constant 1 : index
    %6 = vector.load %arg1[%c0_5, %c0_6, %c1] : memref<1x3x256xf32, #tpu.memory_space<vmem>>, vector<1x3x188xf32>
    %7 = vector.shape_cast %6 : vector<1x3x188xf32> to vector<3x188xf32>
    %8 = arith.truncf %7 : vector<3x188xf32> to vector<3x188xbf16>
    %c3 = arith.constant 3 : index
    %c0_7 = arith.constant 0 : index
    %9 = vector.load %arg5[%c3, %c0_7] : memref<80x188xbf16, #tpu.memory_space<vmem>>, vector<3x188xbf16>
    tpu.vector_store %arg5[%c3, %c0_7], %8 {strides = array<i32>} : memref<80x188xbf16, #tpu.memory_space<vmem>>, vector<3x188xbf16>,
    %c0_8 = arith.constant 0 : index
    %c0_9 = arith.constant 0 : index
    %c2 = arith.constant 2 : index
    %10 = vector.load %arg1[%c0_8, %c0_9, %c2] : memref<1x3x256xf32, #tpu.memory_space<vmem>>, vector<1x3x188xf32>
    %11 = vector.shape_cast %10 : vector<1x3x188xf32> to vector<3x188xf32>
    %12 = arith.truncf %11 : vector<3x188xf32> to vector<3x188xbf16>
    %c6 = arith.constant 6 : index
    %c0_10 = arith.constant 0 : index
    %13 = vector.load %arg5[%c6, %c0_10] : memref<80x188xbf16, #tpu.memory_space<vmem>>, vector<3x188xbf16>
    tpu.vector_store %arg5[%c6, %c0_10], %12 {strides = array<i32>} : memref<80x188xbf16, #tpu.memory_space<vmem>>, vector<3x188xbf16>,
    %c0_11 = arith.constant 0 : index
    %c0_12 = arith.constant 0 : index
    %c3_13 = arith.constant 3 : index
    %14 = vector.load %arg1[%c0_11, %c0_12, %c3_13] : memref<1x3x256xf32, #tpu.memory_space<vmem>>, vector<1x3x188xf32>
    %15 = vector.shape_cast %14 : vector<1x3x188xf32> to vector<3x188xf32>
    %16 = arith.truncf %15 : vector<3x188xf32> to vector<3x188xbf16>
    %c9 = arith.constant 9 : index
    %c0_14 = arith.constant 0 : index
    %17 = vector.load %arg5[%c9, %c0_14] : memref<80x188xbf16, #tpu.memory_space<vmem>>, vector<3x188xbf16>
    tpu.vector_store %arg5[%c9, %c0_14], %16 {strides = array<i32>} : memref<80x188xbf16, #tpu.memory_space<vmem>>, vector<3x188xbf16>,
    %c0_15 = arith.constant 0 : index
    %c0_16 = arith.constant 0 : index
    %c4 = arith.constant 4 : index
    %18 = vector.load %arg1[%c0_15, %c0_16, %c4] : memref<1x3x256xf32, #tpu.memory_space<vmem>>, vector<1x3x188xf32>
    %19 = vector.shape_cast %18 : vector<1x3x188xf32> to vector<3x188xf32>
    %20 = arith.truncf %19 : vector<3x188xf32> to vector<3x188xbf16>
    %c12 = arith.constant 12 : index
    %c0_17 = arith.constant 0 : index
    %21 = vector.load %arg5[%c12, %c0_17] : memref<80x188xbf16, #tpu.memory_space<vmem>>, vector<3x188xbf16>
    tpu.vector_store %arg5[%c12, %c0_17], %20 {strides = array<i32>} : memref<80x188xbf16, #tpu.memory_space<vmem>>, vector<3x188xbf16>,
    %c0_18 = arith.constant 0 : index
    %c0_19 = arith.constant 0 : index
    %c16 = arith.constant 16 : index
    %22 = vector.load %arg1[%c0_18, %c0_19, %c16] : memref<1x3x256xf32, #tpu.memory_space<vmem>>, vector<1x3x188xf32>
    %23 = vector.shape_cast %22 : vector<1x3x188xf32> to vector<3x188xf32>
    %24 = arith.truncf %23 : vector<3x188xf32> to vector<3x188xbf16>
    %c15 = arith.constant 15 : index
    %c0_20 = arith.constant 0 : index
    %25 = vector.load %arg5[%c15, %c0_20] : memref<80x188xbf16, #tpu.memory_space<vmem>>, vector<3x188xbf16>
    tpu.vector_store %arg5[%c15, %c0_20], %24 {strides = array<i32>} : memref<80x188xbf16, #tpu.memory_space<vmem>>, vector<3x188xbf16>,
    %c0_21 = arith.constant 0 : index
    %c0_22 = arith.constant 0 : index
    %c17 = arith.constant 17 : index
    %26 = vector.load %arg1[%c0_21, %c0_22, %c17] : memref<1x3x256xf32, #tpu.memory_space<vmem>>, vector<1x3x188xf32>
    %27 = vector.shape_cast %26 : vector<1x3x188xf32> to vector<3x188xf32>
    %28 = arith.truncf %27 : vector<3x188xf32> to vector<3x188xbf16>
    %c18 = arith.constant 18 : index
    %c0_23 = arith.constant 0 : index
    %29 = vector.load %arg5[%c18, %c0_23] : memref<80x188xbf16, #tpu.memory_space<vmem>>, vector<3x188xbf16>
    tpu.vector_store %arg5[%c18, %c0_23], %28 {strides = array<i32>} : memref<80x188xbf16, #tpu.memory_space<vmem>>, vector<3x188xbf16>,
    %c0_24 = arith.constant 0 : index
    %c0_25 = arith.constant 0 : index
    %c18_26 = arith.constant 18 : index
    %30 = vector.load %arg1[%c0_24, %c0_25, %c18_26] : memref<1x3x256xf32, #tpu.memory_space<vmem>>, vector<1x3x188xf32>
    %31 = vector.shape_cast %30 : vector<1x3x188xf32> to vector<3x188xf32>
    %32 = arith.truncf %31 : vector<3x188xf32> to vector<3x188xbf16>
    %c21 = arith.constant 21 : index
    %c0_27 = arith.constant 0 : index
    %33 = vector.load %arg5[%c21, %c0_27] : memref<80x188xbf16, #tpu.memory_space<vmem>>, vector<3x188xbf16>
    tpu.vector_store %arg5[%c21, %c0_27], %32 {strides = array<i32>} : memref<80x188xbf16, #tpu.memory_space<vmem>>, vector<3x188xbf16>,
    %c0_28 = arith.constant 0 : index
    %c0_29 = arith.constant 0 : index
    %c19 = arith.constant 19 : index
    %34 = vector.load %arg1[%c0_28, %c0_29, %c19] : memref<1x3x256xf32, #tpu.memory_space<vmem>>, vector<1x3x188xf32>
    %35 = vector.shape_cast %34 : vector<1x3x188xf32> to vector<3x188xf32>
    %36 = arith.truncf %35 : vector<3x188xf32> to vector<3x188xbf16>
    %c24 = arith.constant 24 : index
    %c0_30 = arith.constant 0 : index
    %37 = vector.load %arg5[%c24, %c0_30] : memref<80x188xbf16, #tpu.memory_space<vmem>>, vector<3x188xbf16>
    tpu.vector_store %arg5[%c24, %c0_30], %36 {strides = array<i32>} : memref<80x188xbf16, #tpu.memory_space<vmem>>, vector<3x188xbf16>,
    %c0_31 = arith.constant 0 : index
    %c0_32 = arith.constant 0 : index
    %c20 = arith.constant 20 : index
    %38 = vector.load %arg1[%c0_31, %c0_32, %c20] : memref<1x3x256xf32, #tpu.memory_space<vmem>>, vector<1x3x188xf32>
    %39 = vector.shape_cast %38 : vector<1x3x188xf32> to vector<3x188xf32>
    %40 = arith.truncf %39 : vector<3x188xf32> to vector<3x188xbf16>
    %c27 = arith.constant 27 : index
    %c0_33 = arith.constant 0 : index
    %41 = vector.load %arg5[%c27, %c0_33] : memref<80x188xbf16, #tpu.memory_space<vmem>>, vector<3x188xbf16>
    tpu.vector_store %arg5[%c27, %c0_33], %40 {strides = array<i32>} : memref<80x188xbf16, #tpu.memory_space<vmem>>, vector<3x188xbf16>,
    %c0_34 = arith.constant 0 : index
    %c0_35 = arith.constant 0 : index
    %c32 = arith.constant 32 : index
    %42 = vector.load %arg1[%c0_34, %c0_35, %c32] : memref<1x3x256xf32, #tpu.memory_space<vmem>>, vector<1x3x188xf32>
    %43 = vector.shape_cast %42 : vector<1x3x188xf32> to vector<3x188xf32>
    %44 = arith.truncf %43 : vector<3x188xf32> to vector<3x188xbf16>
    %c30 = arith.constant 30 : index
    %c0_36 = arith.constant 0 : index
    %45 = vector.load %arg5[%c30, %c0_36] : memref<80x188xbf16, #tpu.memory_space<vmem>>, vector<3x188xbf16>
    tpu.vector_store %arg5[%c30, %c0_36], %44 {strides = array<i32>} : memref<80x188xbf16, #tpu.memory_space<vmem>>, vector<3x188xbf16>,
    %c0_37 = arith.constant 0 : index
    %c0_38 = arith.constant 0 : index
    %c33 = arith.constant 33 : index
    %46 = vector.load %arg1[%c0_37, %c0_38, %c33] : memref<1x3x256xf32, #tpu.memory_space<vmem>>, vector<1x3x188xf32>
    %47 = vector.shape_cast %46 : vector<1x3x188xf32> to vector<3x188xf32>
    %48 = arith.truncf %47 : vector<3x188xf32> to vector<3x188xbf16>
    %c33_39 = arith.constant 33 : index
    %c0_40 = arith.constant 0 : index
    %49 = vector.load %arg5[%c33_39, %c0_40] : memref<80x188xbf16, #tpu.memory_space<vmem>>, vector<3x188xbf16>
    tpu.vector_store %arg5[%c33_39, %c0_40], %48 {strides = array<i32>} : memref<80x188xbf16, #tpu.memory_space<vmem>>, vector<3x188xbf16>,
    %c0_41 = arith.constant 0 : index
    %c0_42 = arith.constant 0 : index
    %c34 = arith.constant 34 : index
    %50 = vector.load %arg1[%c0_41, %c0_42, %c34] : memref<1x3x256xf32, #tpu.memory_space<vmem>>, vector<1x3x188xf32>
    %51 = vector.shape_cast %50 : vector<1x3x188xf32> to vector<3x188xf32>
    %52 = arith.truncf %51 : vector<3x188xf32> to vector<3x188xbf16>
    %c36 = arith.constant 36 : index
    %c0_43 = arith.constant 0 : index
    %53 = vector.load %arg5[%c36, %c0_43] : memref<80x188xbf16, #tpu.memory_space<vmem>>, vector<3x188xbf16>
    tpu.vector_store %arg5[%c36, %c0_43], %52 {strides = array<i32>} : memref<80x188xbf16, #tpu.memory_space<vmem>>, vector<3x188xbf16>,
    %c0_44 = arith.constant 0 : index
    %c0_45 = arith.constant 0 : index
    %c35 = arith.constant 35 : index
    %54 = vector.load %arg1[%c0_44, %c0_45, %c35] : memref<1x3x256xf32, #tpu.memory_space<vmem>>, vector<1x3x188xf32>
    %55 = vector.shape_cast %54 : vector<1x3x188xf32> to vector<3x188xf32>
    %56 = arith.truncf %55 : vector<3x188xf32> to vector<3x188xbf16>
    %c39 = arith.constant 39 : index
    %c0_46 = arith.constant 0 : index
    %57 = vector.load %arg5[%c39, %c0_46] : memref<80x188xbf16, #tpu.memory_space<vmem>>, vector<3x188xbf16>
    tpu.vector_store %arg5[%c39, %c0_46], %56 {strides = array<i32>} : memref<80x188xbf16, #tpu.memory_space<vmem>>, vector<3x188xbf16>,
    %c0_47 = arith.constant 0 : index
    %c0_48 = arith.constant 0 : index
    %c36_49 = arith.constant 36 : index
    %58 = vector.load %arg1[%c0_47, %c0_48, %c36_49] : memref<1x3x256xf32, #tpu.memory_space<vmem>>, vector<1x3x188xf32>
    %59 = vector.shape_cast %58 : vector<1x3x188xf32> to vector<3x188xf32>
    %60 = arith.truncf %59 : vector<3x188xf32> to vector<3x188xbf16>
    %c42 = arith.constant 42 : index
    %c0_50 = arith.constant 0 : index
    %61 = vector.load %arg5[%c42, %c0_50] : memref<80x188xbf16, #tpu.memory_space<vmem>>, vector<3x188xbf16>
    tpu.vector_store %arg5[%c42, %c0_50], %60 {strides = array<i32>} : memref<80x188xbf16, #tpu.memory_space<vmem>>, vector<3x188xbf16>,
    %c0_51 = arith.constant 0 : index
    %c0_52 = arith.constant 0 : index
    %c48 = arith.constant 48 : index
    %62 = vector.load %arg1[%c0_51, %c0_52, %c48] : memref<1x3x256xf32, #tpu.memory_space<vmem>>, vector<1x3x188xf32>
    %63 = vector.shape_cast %62 : vector<1x3x188xf32> to vector<3x188xf32>
    %64 = arith.truncf %63 : vector<3x188xf32> to vector<3x188xbf16>
    %c45 = arith.constant 45 : index
    %c0_53 = arith.constant 0 : index
    %65 = vector.load %arg5[%c45, %c0_53] : memref<80x188xbf16, #tpu.memory_space<vmem>>, vector<3x188xbf16>
    tpu.vector_store %arg5[%c45, %c0_53], %64 {strides = array<i32>} : memref<80x188xbf16, #tpu.memory_space<vmem>>, vector<3x188xbf16>,
    %c0_54 = arith.constant 0 : index
    %c0_55 = arith.constant 0 : index
    %c49 = arith.constant 49 : index
    %66 = vector.load %arg1[%c0_54, %c0_55, %c49] : memref<1x3x256xf32, #tpu.memory_space<vmem>>, vector<1x3x188xf32>
    %67 = vector.shape_cast %66 : vector<1x3x188xf32> to vector<3x188xf32>
    %68 = arith.truncf %67 : vector<3x188xf32> to vector<3x188xbf16>
    %c48_56 = arith.constant 48 : index
    %c0_57 = arith.constant 0 : index
    %69 = vector.load %arg5[%c48_56, %c0_57] : memref<80x188xbf16, #tpu.memory_space<vmem>>, vector<3x188xbf16>
    tpu.vector_store %arg5[%c48_56, %c0_57], %68 {strides = array<i32>} : memref<80x188xbf16, #tpu.memory_space<vmem>>, vector<3x188xbf16>,
    %c0_58 = arith.constant 0 : index
    %c0_59 = arith.constant 0 : index
    %c50 = arith.constant 50 : index
    %70 = vector.load %arg1[%c0_58, %c0_59, %c50] : memref<1x3x256xf32, #tpu.memory_space<vmem>>, vector<1x3x188xf32>
    %71 = vector.shape_cast %70 : vector<1x3x188xf32> to vector<3x188xf32>
    %72 = arith.truncf %71 : vector<3x188xf32> to vector<3x188xbf16>
    %c51 = arith.constant 51 : index
    %c0_60 = arith.constant 0 : index
    %73 = vector.load %arg5[%c51, %c0_60] : memref<80x188xbf16, #tpu.memory_space<vmem>>, vector<3x188xbf16>
    tpu.vector_store %arg5[%c51, %c0_60], %72 {strides = array<i32>} : memref<80x188xbf16, #tpu.memory_space<vmem>>, vector<3x188xbf16>,
    %c0_61 = arith.constant 0 : index
    %c0_62 = arith.constant 0 : index
    %c51_63 = arith.constant 51 : index
    %74 = vector.load %arg1[%c0_61, %c0_62, %c51_63] : memref<1x3x256xf32, #tpu.memory_space<vmem>>, vector<1x3x188xf32>
    %75 = vector.shape_cast %74 : vector<1x3x188xf32> to vector<3x188xf32>
    %76 = arith.truncf %75 : vector<3x188xf32> to vector<3x188xbf16>
    %c54 = arith.constant 54 : index
    %c0_64 = arith.constant 0 : index
    %77 = vector.load %arg5[%c54, %c0_64] : memref<80x188xbf16, #tpu.memory_space<vmem>>, vector<3x188xbf16>
    tpu.vector_store %arg5[%c54, %c0_64], %76 {strides = array<i32>} : memref<80x188xbf16, #tpu.memory_space<vmem>>, vector<3x188xbf16>,
    %c0_65 = arith.constant 0 : index
    %c0_66 = arith.constant 0 : index
    %c52 = arith.constant 52 : index
    %78 = vector.load %arg1[%c0_65, %c0_66, %c52] : memref<1x3x256xf32, #tpu.memory_space<vmem>>, vector<1x3x188xf32>
    %79 = vector.shape_cast %78 : vector<1x3x188xf32> to vector<3x188xf32>
    %80 = arith.truncf %79 : vector<3x188xf32> to vector<3x188xbf16>
    %c57 = arith.constant 57 : index
    %c0_67 = arith.constant 0 : index
    %81 = vector.load %arg5[%c57, %c0_67] : memref<80x188xbf16, #tpu.memory_space<vmem>>, vector<3x188xbf16>
    tpu.vector_store %arg5[%c57, %c0_67], %80 {strides = array<i32>} : memref<80x188xbf16, #tpu.memory_space<vmem>>, vector<3x188xbf16>,
    %c0_68 = arith.constant 0 : index
    %c0_69 = arith.constant 0 : index
    %c64 = arith.constant 64 : index
    %82 = vector.load %arg1[%c0_68, %c0_69, %c64] : memref<1x3x256xf32, #tpu.memory_space<vmem>>, vector<1x3x188xf32>
    %83 = vector.shape_cast %82 : vector<1x3x188xf32> to vector<3x188xf32>
    %84 = arith.truncf %83 : vector<3x188xf32> to vector<3x188xbf16>
    %c60 = arith.constant 60 : index
    %c0_70 = arith.constant 0 : index
    %85 = vector.load %arg5[%c60, %c0_70] : memref<80x188xbf16, #tpu.memory_space<vmem>>, vector<3x188xbf16>
    tpu.vector_store %arg5[%c60, %c0_70], %84 {strides = array<i32>} : memref<80x188xbf16, #tpu.memory_space<vmem>>, vector<3x188xbf16>,
    %c0_71 = arith.constant 0 : index
    %c0_72 = arith.constant 0 : index
    %c65 = arith.constant 65 : index
    %86 = vector.load %arg1[%c0_71, %c0_72, %c65] : memref<1x3x256xf32, #tpu.memory_space<vmem>>, vector<1x3x188xf32>
    %87 = vector.shape_cast %86 : vector<1x3x188xf32> to vector<3x188xf32>
    %88 = arith.truncf %87 : vector<3x188xf32> to vector<3x188xbf16>
    %c63 = arith.constant 63 : index
    %c0_73 = arith.constant 0 : index
    %89 = vector.load %arg5[%c63, %c0_73] : memref<80x188xbf16, #tpu.memory_space<vmem>>, vector<3x188xbf16>
    tpu.vector_store %arg5[%c63, %c0_73], %88 {strides = array<i32>} : memref<80x188xbf16, #tpu.memory_space<vmem>>, vector<3x188xbf16>,
    %c0_74 = arith.constant 0 : index
    %c0_75 = arith.constant 0 : index
    %c66 = arith.constant 66 : index
    %90 = vector.load %arg1[%c0_74, %c0_75, %c66] : memref<1x3x256xf32, #tpu.memory_space<vmem>>, vector<1x3x188xf32>
    %91 = vector.shape_cast %90 : vector<1x3x188xf32> to vector<3x188xf32>
    %92 = arith.truncf %91 : vector<3x188xf32> to vector<3x188xbf16>
    %c66_76 = arith.constant 66 : index
    %c0_77 = arith.constant 0 : index
    %93 = vector.load %arg5[%c66_76, %c0_77] : memref<80x188xbf16, #tpu.memory_space<vmem>>, vector<3x188xbf16>
    tpu.vector_store %arg5[%c66_76, %c0_77], %92 {strides = array<i32>} : memref<80x188xbf16, #tpu.memory_space<vmem>>, vector<3x188xbf16>,
    %c0_78 = arith.constant 0 : index
    %c0_79 = arith.constant 0 : index
    %c67 = arith.constant 67 : index
    %94 = vector.load %arg1[%c0_78, %c0_79, %c67] : memref<1x3x256xf32, #tpu.memory_space<vmem>>, vector<1x3x188xf32>
    %95 = vector.shape_cast %94 : vector<1x3x188xf32> to vector<3x188xf32>
    %96 = arith.truncf %95 : vector<3x188xf32> to vector<3x188xbf16>
    %c69 = arith.constant 69 : index
    %c0_80 = arith.constant 0 : index
    %97 = vector.load %arg5[%c69, %c0_80] : memref<80x188xbf16, #tpu.memory_space<vmem>>, vector<3x188xbf16>
    tpu.vector_store %arg5[%c69, %c0_80], %96 {strides = array<i32>} : memref<80x188xbf16, #tpu.memory_space<vmem>>, vector<3x188xbf16>,
    %c0_81 = arith.constant 0 : index
    %c0_82 = arith.constant 0 : index
    %c68 = arith.constant 68 : index
    %98 = vector.load %arg1[%c0_81, %c0_82, %c68] : memref<1x3x256xf32, #tpu.memory_space<vmem>>, vector<1x3x188xf32>
    %99 = vector.shape_cast %98 : vector<1x3x188xf32> to vector<3x188xf32>
    %100 = arith.truncf %99 : vector<3x188xf32> to vector<3x188xbf16>
    %c72 = arith.constant 72 : index
    %c0_83 = arith.constant 0 : index
    %101 = vector.load %arg5[%c72, %c0_83] : memref<80x188xbf16, #tpu.memory_space<vmem>>, vector<3x188xbf16>
    tpu.vector_store %arg5[%c72, %c0_83], %100 {strides = array<i32>} : memref<80x188xbf16, #tpu.memory_space<vmem>>, vector<3x188xbf16>,
    %c0_84 = arith.constant 0 : index
    %c0_85 = arith.constant 0 : index
    %102 = vector.load %arg2[%c0_84, %c0_85] : memref<16x80xbf16, #tpu.memory_space<vmem>>, vector<16x80xbf16>
    %c0_86 = arith.constant 0 : index
    %c0_87 = arith.constant 0 : index
    %103 = vector.load %arg5[%c0_86, %c0_87] : memref<80x188xbf16, #tpu.memory_space<vmem>>, vector<80x188xbf16>
    %cst_88 = arith.constant dense<0.000000e+00> : vector<16x188xf32>
    %104 = tpu.matmul %102, %103, %cst_88 {dimension_numbers = #tpu.dot_dimension_numbers<[1], [0], [0], [1], [0, 0, 1, 1], [], []>} : vector<16x80xbf16>, vector<80x188xbf16>, vector<16x188xf32> -> vector<16x188xf32>
    %c0_89 = arith.constant 0 : index
    %c0_90 = arith.constant 0 : index
    %105 = vector.load %arg3[%c0_89, %c0_90] : memref<16x1xf32, #tpu.memory_space<vmem>>, vector<16x1xf32>
    %106 = vector.broadcast %105 : vector<16x1xf32> to vector<16x188xf32>
    %107 = arith.addf %104, %106 : vector<16x188xf32>
    %108 = vector.extract_strided_slice %107 {offsets = [0, 0], sizes = [16, 12], strides = [1, 1]} : vector<16x188xf32> to vector<16x12xf32>
    %c0_91 = arith.constant 0 : index
    %c0_92 = arith.constant 0 : index
    %c0_93 = arith.constant 0 : index
    %c0_94 = arith.constant 0 : index
    %109 = vector.load %arg4[%c0_91, %c0_92, %c0_93, %c0_94] : memref<1x16x12x12xf32, #tpu.memory_space<vmem>>, vector<1x16x1x12xf32>
    %110 = vector.shape_cast %109 : vector<1x16x1x12xf32> to vector<16x12xf32>
    %111 = vector.shape_cast %108 : vector<16x12xf32> to vector<1x16x1x12xf32>
    tpu.vector_store %arg4[%c0_91, %c0_92, %c0_93, %c0_94], %111 {strides = array<i32>} : memref<1x16x12x12xf32, #tpu.memory_space<vmem>>, vector<1x16x1x12xf32>,
    %112 = vector.extract_strided_slice %107 {offsets = [0, 16], sizes = [16, 12], strides = [1, 1]} : vector<16x188xf32> to vector<16x12xf32>
    %c0_95 = arith.constant 0 : index
    %c0_96 = arith.constant 0 : index
    %c1_97 = arith.constant 1 : index
    %c0_98 = arith.constant 0 : index
    %113 = vector.load %arg4[%c0_95, %c0_96, %c1_97, %c0_98] : memref<1x16x12x12xf32, #tpu.memory_space<vmem>>, vector<1x16x1x12xf32>
    %114 = vector.shape_cast %113 : vector<1x16x1x12xf32> to vector<16x12xf32>
    %115 = vector.shape_cast %112 : vector<16x12xf32> to vector<1x16x1x12xf32>
    tpu.vector_store %arg4[%c0_95, %c0_96, %c1_97, %c0_98], %115 {strides = array<i32>} : memref<1x16x12x12xf32, #tpu.memory_space<vmem>>, vector<1x16x1x12xf32>,
    %116 = vector.extract_strided_slice %107 {offsets = [0, 32], sizes = [16, 12], strides = [1, 1]} : vector<16x188xf32> to vector<16x12xf32>
    %c0_99 = arith.constant 0 : index
    %c0_100 = arith.constant 0 : index
    %c2_101 = arith.constant 2 : index
    %c0_102 = arith.constant 0 : index
    %117 = vector.load %arg4[%c0_99, %c0_100, %c2_101, %c0_102] : memref<1x16x12x12xf32, #tpu.memory_space<vmem>>, vector<1x16x1x12xf32>
    %118 = vector.shape_cast %117 : vector<1x16x1x12xf32> to vector<16x12xf32>
    %119 = vector.shape_cast %116 : vector<16x12xf32> to vector<1x16x1x12xf32>
    tpu.vector_store %arg4[%c0_99, %c0_100, %c2_101, %c0_102], %119 {strides = array<i32>} : memref<1x16x12x12xf32, #tpu.memory_space<vmem>>, vector<1x16x1x12xf32>,
    %120 = vector.extract_strided_slice %107 {offsets = [0, 48], sizes = [16, 12], strides = [1, 1]} : vector<16x188xf32> to vector<16x12xf32>
    %c0_103 = arith.constant 0 : index
    %c0_104 = arith.constant 0 : index
    %c3_105 = arith.constant 3 : index
    %c0_106 = arith.constant 0 : index
    %121 = vector.load %arg4[%c0_103, %c0_104, %c3_105, %c0_106] : memref<1x16x12x12xf32, #tpu.memory_space<vmem>>, vector<1x16x1x12xf32>
    %122 = vector.shape_cast %121 : vector<1x16x1x12xf32> to vector<16x12xf32>
    %123 = vector.shape_cast %120 : vector<16x12xf32> to vector<1x16x1x12xf32>
    tpu.vector_store %arg4[%c0_103, %c0_104, %c3_105, %c0_106], %123 {strides = array<i32>} : memref<1x16x12x12xf32, #tpu.memory_space<vmem>>, vector<1x16x1x12xf32>,
    %124 = vector.extract_strided_slice %107 {offsets = [0, 64], sizes = [16, 12], strides = [1, 1]} : vector<16x188xf32> to vector<16x12xf32>
    %c0_107 = arith.constant 0 : index
    %c0_108 = arith.constant 0 : index
    %c4_109 = arith.constant 4 : index
    %c0_110 = arith.constant 0 : index
    %125 = vector.load %arg4[%c0_107, %c0_108, %c4_109, %c0_110] : memref<1x16x12x12xf32, #tpu.memory_space<vmem>>, vector<1x16x1x12xf32>
    %126 = vector.shape_cast %125 : vector<1x16x1x12xf32> to vector<16x12xf32>
    %127 = vector.shape_cast %124 : vector<16x12xf32> to vector<1x16x1x12xf32>
    tpu.vector_store %arg4[%c0_107, %c0_108, %c4_109, %c0_110], %127 {strides = array<i32>} : memref<1x16x12x12xf32, #tpu.memory_space<vmem>>, vector<1x16x1x12xf32>,
    %128 = vector.extract_strided_slice %107 {offsets = [0, 80], sizes = [16, 12], strides = [1, 1]} : vector<16x188xf32> to vector<16x12xf32>
    %c0_111 = arith.constant 0 : index
    %c0_112 = arith.constant 0 : index
    %c5 = arith.constant 5 : index
    %c0_113 = arith.constant 0 : index
    %129 = vector.load %arg4[%c0_111, %c0_112, %c5, %c0_113] : memref<1x16x12x12xf32, #tpu.memory_space<vmem>>, vector<1x16x1x12xf32>
    %130 = vector.shape_cast %129 : vector<1x16x1x12xf32> to vector<16x12xf32>
    %131 = vector.shape_cast %128 : vector<16x12xf32> to vector<1x16x1x12xf32>
    tpu.vector_store %arg4[%c0_111, %c0_112, %c5, %c0_113], %131 {strides = array<i32>} : memref<1x16x12x12xf32, #tpu.memory_space<vmem>>, vector<1x16x1x12xf32>,
    %132 = vector.extract_strided_slice %107 {offsets = [0, 96], sizes = [16, 12], strides = [1, 1]} : vector<16x188xf32> to vector<16x12xf32>
    %c0_114 = arith.constant 0 : index
    %c0_115 = arith.constant 0 : index
    %c6_116 = arith.constant 6 : index
    %c0_117 = arith.constant 0 : index
    %133 = vector.load %arg4[%c0_114, %c0_115, %c6_116, %c0_117] : memref<1x16x12x12xf32, #tpu.memory_space<vmem>>, vector<1x16x1x12xf32>
    %134 = vector.shape_cast %133 : vector<1x16x1x12xf32> to vector<16x12xf32>
    %135 = vector.shape_cast %132 : vector<16x12xf32> to vector<1x16x1x12xf32>
    tpu.vector_store %arg4[%c0_114, %c0_115, %c6_116, %c0_117], %135 {strides = array<i32>} : memref<1x16x12x12xf32, #tpu.memory_space<vmem>>, vector<1x16x1x12xf32>,
    %136 = vector.extract_strided_slice %107 {offsets = [0, 112], sizes = [16, 12], strides = [1, 1]} : vector<16x188xf32> to vector<16x12xf32>
    %c0_118 = arith.constant 0 : index
    %c0_119 = arith.constant 0 : index
    %c7 = arith.constant 7 : index
    %c0_120 = arith.constant 0 : index
    %137 = vector.load %arg4[%c0_118, %c0_119, %c7, %c0_120] : memref<1x16x12x12xf32, #tpu.memory_space<vmem>>, vector<1x16x1x12xf32>
    %138 = vector.shape_cast %137 : vector<1x16x1x12xf32> to vector<16x12xf32>
    %139 = vector.shape_cast %136 : vector<16x12xf32> to vector<1x16x1x12xf32>
    tpu.vector_store %arg4[%c0_118, %c0_119, %c7, %c0_120], %139 {strides = array<i32>} : memref<1x16x12x12xf32, #tpu.memory_space<vmem>>, vector<1x16x1x12xf32>,
    %140 = vector.extract_strided_slice %107 {offsets = [0, 128], sizes = [16, 12], strides = [1, 1]} : vector<16x188xf32> to vector<16x12xf32>
    %c0_121 = arith.constant 0 : index
    %c0_122 = arith.constant 0 : index
    %c8 = arith.constant 8 : index
    %c0_123 = arith.constant 0 : index
    %141 = vector.load %arg4[%c0_121, %c0_122, %c8, %c0_123] : memref<1x16x12x12xf32, #tpu.memory_space<vmem>>, vector<1x16x1x12xf32>
    %142 = vector.shape_cast %141 : vector<1x16x1x12xf32> to vector<16x12xf32>
    %143 = vector.shape_cast %140 : vector<16x12xf32> to vector<1x16x1x12xf32>
    tpu.vector_store %arg4[%c0_121, %c0_122, %c8, %c0_123], %143 {strides = array<i32>} : memref<1x16x12x12xf32, #tpu.memory_space<vmem>>, vector<1x16x1x12xf32>,
    %144 = vector.extract_strided_slice %107 {offsets = [0, 144], sizes = [16, 12], strides = [1, 1]} : vector<16x188xf32> to vector<16x12xf32>
    %c0_124 = arith.constant 0 : index
    %c0_125 = arith.constant 0 : index
    %c9_126 = arith.constant 9 : index
    %c0_127 = arith.constant 0 : index
    %145 = vector.load %arg4[%c0_124, %c0_125, %c9_126, %c0_127] : memref<1x16x12x12xf32, #tpu.memory_space<vmem>>, vector<1x16x1x12xf32>
    %146 = vector.shape_cast %145 : vector<1x16x1x12xf32> to vector<16x12xf32>
    %147 = vector.shape_cast %144 : vector<16x12xf32> to vector<1x16x1x12xf32>
    tpu.vector_store %arg4[%c0_124, %c0_125, %c9_126, %c0_127], %147 {strides = array<i32>} : memref<1x16x12x12xf32, #tpu.memory_space<vmem>>, vector<1x16x1x12xf32>,
    %148 = vector.extract_strided_slice %107 {offsets = [0, 160], sizes = [16, 12], strides = [1, 1]} : vector<16x188xf32> to vector<16x12xf32>
    %c0_128 = arith.constant 0 : index
    %c0_129 = arith.constant 0 : index
    %c10 = arith.constant 10 : index
    %c0_130 = arith.constant 0 : index
    %149 = vector.load %arg4[%c0_128, %c0_129, %c10, %c0_130] : memref<1x16x12x12xf32, #tpu.memory_space<vmem>>, vector<1x16x1x12xf32>
    %150 = vector.shape_cast %149 : vector<1x16x1x12xf32> to vector<16x12xf32>
    %151 = vector.shape_cast %148 : vector<16x12xf32> to vector<1x16x1x12xf32>
    tpu.vector_store %arg4[%c0_128, %c0_129, %c10, %c0_130], %151 {strides = array<i32>} : memref<1x16x12x12xf32, #tpu.memory_space<vmem>>, vector<1x16x1x12xf32>,
    %152 = vector.extract_strided_slice %107 {offsets = [0, 176], sizes = [16, 12], strides = [1, 1]} : vector<16x188xf32> to vector<16x12xf32>
    %c0_131 = arith.constant 0 : index
    %c0_132 = arith.constant 0 : index
    %c11 = arith.constant 11 : index
    %c0_133 = arith.constant 0 : index
    %153 = vector.load %arg4[%c0_131, %c0_132, %c11, %c0_133] : memref<1x16x12x12xf32, #tpu.memory_space<vmem>>, vector<1x16x1x12xf32>
    %154 = vector.shape_cast %153 : vector<1x16x1x12xf32> to vector<16x12xf32>
    %155 = vector.shape_cast %152 : vector<16x12xf32> to vector<1x16x1x12xf32>
    tpu.vector_store %arg4[%c0_131, %c0_132, %c11, %c0_133], %155 {strides = array<i32>} : memref<1x16x12x12xf32, #tpu.memory_space<vmem>>, vector<1x16x1x12xf32>,
    return
  }
  func.func @transform_0(%arg0: i32) -> (i32, i32, i32) {
    %c0_i32 = arith.constant 0 : i32
    %c0_i32_0 = arith.constant 0 : i32
    %c0_i32_1 = arith.constant 0 : i32
    return %arg0, %c0_i32, %c0_i32_0 : i32, i32, i32
  }
  func.func @transform_1(%arg0: i32) -> (i32, i32) {
    %c0_i32 = arith.constant 0 : i32
    %c0_i32_0 = arith.constant 0 : i32
    %c0_i32_1 = arith.constant 0 : i32
    return %c0_i32, %c0_i32_0 : i32, i32
  }
  func.func @transform_2(%arg0: i32) -> (i32, i32) {
    %c0_i32 = arith.constant 0 : i32
    %c0_i32_0 = arith.constant 0 : i32
    %c0_i32_1 = arith.constant 0 : i32
    return %c0_i32, %c0_i32_0 : i32, i32
  }
  func.func @transform_3(%arg0: i32) -> (i32, i32, i32, i32) {
    %c0_i32 = arith.constant 0 : i32
    %c0_i32_0 = arith.constant 0 : i32
    %c0_i32_1 = arith.constant 0 : i32
    %c0_i32_2 = arith.constant 0 : i32
    return %arg0, %c0_i32, %c0_i32_0, %c0_i32_1 : i32, i32, i32, i32
  }
}

</mosaic_0001>

<llo_original>
// kernel: ssegnet_forward.1
$region0: #{ssegnet_forward.1}
  #allocation0 [shape = 'u32[]', space=smem, size = 0x4, offset = 0x4, fixed_abs, tag = 'smem constant byte address 0x4 - core index']
  #allocation1 [shape = 'u32[144,128]{1,0:T(1,128)}', space=vmem, size = 0x12000, scoped, tag = 'internal scratch']
  #allocation2 [shape = 'bf16[80,188]{1,0:T(16,128)(2,1)}', space=vmem, size = 0xa000, scoped, tag = 'scratch operand']
  %s0 = inlined_call_operand.vmem [shape: f32[2,3,256], index: 0, kind: input, shape index: {}]
  %s1 = inlined_call_operand.vmem [shape: bf16[16,80], index: 1, kind: input, shape index: {}]
  %s2 = inlined_call_operand.vmem [shape: f32[16,1], index: 2, kind: input, shape index: {}]
  %s3 = inlined_call_operand.vmem [shape: f32[2,16,12,12], index: 3, kind: output, shape index: {}]
  %s4 = sld [smem:[#allocation0]]
  $region45: #{ssegnet_forward.1} parent=0
    _
  %s6 = ssub.s32 1, %s4
  %s7 = scalar_select 0, %s6, %s4
  loop: start=0, step=1, limit=4
  $region2: #{ssegnet_forward.1} parent=0 // loop_pre_header
    _
  $region3: #{ssegnet_forward.1} parent=0 // loop_header
    %s9 = sphi 0, %s13
    %p10 = scmp.ge.s32.totalorder %s9, 4
    %s19 = sphi 0, %s21
    %s22 = sphi 0, %s19
    %s23 = sphi 0, %s22
    %s39 = sphi 0, %s23
    %s43 = sphi 0, %s43
    %s45 = sphi 0, %s43
    %s46 = sphi 0, %s45
    %s60 = sphi 0, %s46
    %s64 = sphi 0, %s64
    %s66 = sphi 0, %s64
    %s67 = sphi 0, %s66
    %s81 = sphi 0, %s67
    %s87 = sphi 0, %s89
    %s90 = sphi 0, %s87
    %s91 = sphi 0, %s90
    %s107 = sphi 0, %s91
  $region4: #{ssegnet_forward.1} parent=0 // loop_header_branch
    %12 = sbr.rel (%p10) target = $region8
  $region5: #{ssegnet_forward.1} parent=0 // loop_body
    %s14 = ssub.s32 %s9, 1
    %s15 = ssub.s32 %s9, 2
    %s16 = sadd.s32 %s9, 1
    %s17 = ssub.s32 %s9, %s16
    %p18 = scmp.eq.s32.totalorder %s17, 0
    %s20 = sadd.s32 %s19, 1
    %s21 = scalar_select %p18, %s19, %s20
    %p24 = pneg %p18
    %p25 = scmp.eq.s32.totalorder %s9, 1
    %p26 = por %p24, %p25
    %p27 = scmp.ne.s32.totalorder %s19, %s22
    %p28 = scmp.eq.s32.totalorder %s9, 0
    %p29 = por %p27, %p28
    %p30 = scmp.ne.s32.totalorder %s19, %s22
    %p31 = scmp.eq.s32.totalorder %s14, 1
    %p32 = por %p30, %p31
    %p33 = scmp.ne.s32.totalorder %s22, %s23
    %p34 = scmp.eq.s32.totalorder %s14, 0
    %p35 = por %p33, %p34
    %p36 = scmp.ne.s32.totalorder %s22, %s23
    %p37 = scmp.eq.s32.totalorder %s15, 1
    %p38 = por %p36, %p37
    %p40 = scmp.ne.s32.totalorder %s23, %s39
    %p41 = scmp.eq.s32.totalorder %s15, 0
    %p42 = por %p40, %p41
    %s44 = sadd.s32 %s43, 1
    %p47 = scmp.eq.s32.totalorder %s9, 1
    %p48 = scmp.ne.s32.totalorder %s43, %s45
    %p49 = scmp.eq.s32.totalorder %s9, 0
    %p50 = por %p48, %p49
    %p51 = scmp.ne.s32.totalorder %s43, %s45
    %p52 = scmp.eq.s32.totalorder %s14, 1
    %p53 = por %p51, %p52
    %p54 = scmp.ne.s32.totalorder %s45, %s46
    %p55 = scmp.eq.s32.totalorder %s14, 0
    %p56 = por %p54, %p55
    %p57 = scmp.ne.s32.totalorder %s45, %s46
    %p58 = scmp.eq.s32.totalorder %s15, 1
    %p59 = por %p57, %p58
    %p61 = scmp.ne.s32.totalorder %s46, %s60
    %p62 = scmp.eq.s32.totalorder %s15, 0
    %p63 = por %p61, %p62
    %s65 = sadd.s32 %s64, 1
    %p68 = scmp.eq.s32.totalorder %s9, 1
    %p69 = scmp.ne.s32.totalorder %s64, %s66
    %p70 = scmp.eq.s32.totalorder %s9, 0
    %p71 = por %p69, %p70
    %p72 = scmp.ne.s32.totalorder %s64, %s66
    %p73 = scmp.eq.s32.totalorder %s14, 1
    %p74 = por %p72, %p73
    %p75 = scmp.ne.s32.totalorder %s66, %s67
    %p76 = scmp.eq.s32.totalorder %s14, 0
    %p77 = por %p75, %p76
    %p78 = scmp.ne.s32.totalorder %s66, %s67
    %p79 = scmp.eq.s32.totalorder %s15, 1
    %p80 = por %p78, %p79
    %p82 = scmp.ne.s32.totalorder %s67, %s81
    %p83 = scmp.eq.s32.totalorder %s15, 0
    %p84 = por %p82, %p83
    %s85 = ssub.s32 %s9, %s16
    %p86 = scmp.eq.s32.totalorder %s85, 0
    %s88 = sadd.s32 %s87, 1
    %s89 = scalar_select %p86, %s87, %s88
    %p92 = pneg %p86
    %p93 = scmp.eq.s32.totalorder %s9, 1
    %p94 = por %p92, %p93
    %p95 = scmp.ne.s32.totalorder %s87, %s90
    %p96 = scmp.eq.s32.totalorder %s9, 0
    %p97 = por %p95, %p96
    %p98 = scmp.ne.s32.totalorder %s87, %s90
    %p99 = scmp.eq.s32.totalorder %s14, 1
    %p100 = por %p98, %p99
    %p101 = scmp.ne.s32.totalorder %s90, %s91
    %p102 = scmp.eq.s32.totalorder %s14, 0
    %p103 = por %p101, %p102
    %p104 = scmp.ne.s32.totalorder %s90, %s91
    %p105 = scmp.eq.s32.totalorder %s15, 1
    %p106 = por %p104, %p105
    %p108 = scmp.ne.s32.totalorder %s91, %s107
    %p109 = scmp.eq.s32.totalorder %s15, 0
    %p110 = por %p108, %p109
    %p111 = scmp.le.s32.totalorder 1, %s9
    %p112 = scmp.lt.s32.totalorder %s9, 3
    %p113 = pnand %p111, %p112
    %p114 = pneg %p113
    // Predicated region
    $region9: #{ssegnet_forward.1} parent=5 // pred_check
      _
    $region10: #{ssegnet_forward.1} parent=5 // pred_check_branch
      %116 = sbr.rel (%p113) target = $region12
    $region11: #{ssegnet_forward.1} parent=5 // pred_region
      %s117 = ssub.s32 %s9, 1
      // Predicated region
      $region13: #{ssegnet_forward.1} parent=11 // pred_check
        %p118 = pneg %p56
      $region14: #{ssegnet_forward.1} parent=11 // pred_check_branch
        %120 = sbr.rel (%p118) target = $region16
      $region15: #{ssegnet_forward.1} parent=11 // pred_region
        _
      $region16: #{ssegnet_forward.1} parent=11 // pred_fallthru
        _
      // Predicated region
      $region17: #{ssegnet_forward.1} parent=11 // pred_check
        %p121 = pneg %p77
      $region18: #{ssegnet_forward.1} parent=11 // pred_check_branch
        %123 = sbr.rel (%p121) target = $region20
      $region19: #{ssegnet_forward.1} parent=11 // pred_region
        _
      $region20: #{ssegnet_forward.1} parent=11 // pred_fallthru
        _
    $region12: #{ssegnet_forward.1} parent=5 // pred_fallthru
      _
    %p124 = scmp.lt.s32.totalorder %s9, 2
    // Predicated region
    $region21: #{ssegnet_forward.1} parent=5 // pred_check
      %p125 = pneg %p124
    $region22: #{ssegnet_forward.1} parent=5 // pred_check_branch
      %127 = sbr.rel (%p125) target = $region24
    $region23: #{ssegnet_forward.1} parent=5 // pred_region
      // Predicated region
      $region25: #{ssegnet_forward.1} parent=23 // pred_check
        %p128 = pneg %p29
      $region26: #{ssegnet_forward.1} parent=23 // pred_check_branch
        %130 = sbr.rel (%p128) target = $region28
      $region27: #{ssegnet_forward.1} parent=23 // pred_region
        %p131 = scmp.lt.s32.totalorder %s9, 1
        %s132 = scalar_select %p131, %s9, 1
        %s133 = smul.addr %s132, 2
        %s134 = smul.addr %s133, 4
        %s135 = scalar_lea.vmem %s0, %s134
      $region28: #{ssegnet_forward.1} parent=23 // pred_fallthru
        _
    $region24: #{ssegnet_forward.1} parent=5 // pred_fallthru
      _
    %p136 = scmp.le.s32.totalorder 1, %s9
    %p137 = scmp.lt.s32.totalorder %s9, 3
    %p138 = pnand %p136, %p137
    %p139 = pneg %p138
    // Predicated region
    $region29: #{ssegnet_forward.1} parent=5 // pred_check
      _
    $region30: #{ssegnet_forward.1} parent=5 // pred_check_branch
      %141 = sbr.rel (%p138) target = $region32
    $region31: #{ssegnet_forward.1} parent=5 // pred_region
      %s142 = ssub.s32 %s9, 1
      %p143 = scmp.lt.s32.totalorder %s14, 1
      %s144 = scalar_select %p143, %s14, 1
      %s145 = smul.addr %s144, 2
      %s146 = smul.addr %s145, 4
      %s147 = scalar_lea.vmem %s0, %s146
      %p148 = pneg %p35
      %p149 = pneg %p32
      %p150 = pneg %p56
      %p151 = pneg %p53
      %p152 = pneg %p77
      %p153 = pneg %p74
      %p154 = pneg %p103
      %p155 = pneg %p100
      %p156 = scmp.lt.s32.totalorder %s14, 1
      %s157 = scalar_select %p156, %s14, 1
      %s158 = smul.addr %s157, 32
      %s159 = smul.addr %s158, 8
      %s160 = scalar_lea.vmem %s3, %s159
      %p161 = scmp.lt.s32.totalorder %s14, 1
      %s162 = scalar_select %p161, %s14, 1
      %s163 = smul.addr %s162, 2
      %s164 = smul.addr %s163, 4
      %s165 = scalar_lea.vmem %s0, %s164
      %p166 = scmp.lt.s32.totalorder %s14, 1
      %s167 = scalar_select %p166, %s14, 1
      %s168 = smul.addr %s167, 32
      %s169 = smul.addr %s168, 8
      %s170 = scalar_lea.vmem %s3, %s169
      %vm172 = vcmask 1047557
      %vm173 = vsmask.f32 7958
      %vm174 = vmand %vm172, %vm173
      %v175 = vld [vmem:[#allocation2 + $0x40] sm:$0xe0]
      %v176 = vsel %vm174, 0, %v175
      %177 = vst [vmem:[#allocation2 + $0x40] sm:$0xe0] %v176
      %vm178 = vcmask 490501
      %vm179 = vmand %vm178, %vm173
      %v180 = vld [vmem:[#allocation2 + $0x48] sm:$0xe0]
      %v181 = vsel %vm179, 0, %v180
      %182 = vst [vmem:[#allocation2 + $0x48] sm:$0xe0] %v181
      %v183 = vld [vmem:[%s165] sm:$0x77]
      %v185 = vcombine.high %v183, %v183
      %v187 = vpack.c.bf16 %v183, %v183
      %v188 = vpack.c.bf16 %v185, %v185
      %vm189 = vcmask 1041408
      %vm190 = vsmask.f32 1280
      %vm191 = vmand %vm189, %vm190
      %v192 = vld [vmem:[#allocation2] sm:$0x3]
      %v193 = vsel %vm191, %v187, %v192
      %194 = vst [vmem:[#allocation2] sm:$0x3] %v193
      %vm195 = vcmask 484352
      %vm196 = vmand %vm195, %vm190
      %v197 = vld [vmem:[#allocation2 + $0x8] sm:$0x3]
      %v198 = vsel %vm196, %v188, %v197
      %199 = vst [vmem:[#allocation2 + $0x8] sm:$0x3] %v198
      %v200 = vld [vmem:[%s165] sm:$0x77]
      %v202 = vcombine.high %v200, %v200
      %v204 = vpack.c.bf16 %v200, %v200
      %v205 = vpack.c.bf16 %v202, %v202
      %v207 = vshrl.u32 %v204, 16
      %v209 = vrot.slane %v207, 6
      %v210 = vshll.u32 %v204, 16
      %v212 = vrot.slane %v210, 7
      %v213 = vor.u32 %v209, %v212
      %v215 = vshrl.u32 %v205, 16
      %v217 = vrot.slane %v215, 6
      %v218 = vshll.u32 %v205, 16
      %v220 = vrot.slane %v218, 7
      %v221 = vor.u32 %v217, %v220
      %222 = vrot.lane.b32.xlu0 %v213, 127
      %v223 = vpop.permute.xlu0 %222
      %224 = vrot.lane.b32.xlu0 %v221, 127
      %v225 = vpop.permute.xlu0 %224
      %vm226 = vcmask 1039360
      %v227 = vsel %vm226, %v223, %v225
      %vm230 = vcmask 1042433
      %vm231 = vsmask.f32 7942
      %vm232 = vmand %vm230, %vm231
      %v233 = vld [vmem:[#allocation2] sm:$0x6]
      %v234 = vsel %vm232, %v227, %v233
      %235 = vst [vmem:[#allocation2] sm:$0x6] %v234
      %vm236 = vcmask 485377
      %vm237 = vmand %vm236, %vm231
      %v238 = vld [vmem:[#allocation2 + $0x8] sm:$0x6]
      %v239 = vsel %vm237, %v225, %v238
      %240 = vst [vmem:[#allocation2 + $0x8] sm:$0x6] %v239
      %v241 = vld [vmem:[%s165] sm:$0x77]
      %v243 = vcombine.high %v241, %v241
      %v245 = vpack.c.bf16 %v241, %v241
      %v246 = vpack.c.bf16 %v243, %v243
      %v249 = vrot.slane %v245, 5
      %v250 = vrot.slane %v246, 5
      %251 = vrot.lane.b32.xlu0 %v249, 126
      %v252 = vpop.permute.xlu0 %251
      %253 = vrot.lane.b32.xlu0 %v250, 126
      %v254 = vpop.permute.xlu0 %253
      %vm255 = vcmask 1031168
      %v256 = vsel %vm255, %v252, %v254
      %vm259 = vcmask 1044483
      %vm260 = vsmask.f32 4352
      %vm261 = vmand %vm259, %vm260
      %v262 = vld [vmem:[#allocation2] sm:$0x18]
      %v263 = vsel %vm261, %v256, %v262
      %264 = vst [vmem:[#allocation2] sm:$0x18] %v263
      %vm265 = vcmask 487427
      %vm266 = vmand %vm265, %vm260
      %v267 = vld [vmem:[#allocation2 + $0x8] sm:$0x18]
      %v268 = vsel %vm266, %v254, %v267
      %269 = vst [vmem:[#allocation2 + $0x8] sm:$0x18] %v268
      %v270 = vld [vmem:[%s165] sm:$0x77]
      %v272 = vcombine.high %v270, %v270
      %v274 = vpack.c.bf16 %v270, %v270
      %v275 = vpack.c.bf16 %v272, %v272
      %v277 = vshrl.u32 %v274, 16
      %v279 = vrot.slane %v277, 3
      %v280 = vshll.u32 %v274, 16
      %v282 = vrot.slane %v280, 4
      %v283 = vor.u32 %v279, %v282
      %v285 = vshrl.u32 %v275, 16
      %v287 = vrot.slane %v285, 3
      %v288 = vshll.u32 %v275, 16
      %v290 = vrot.slane %v288, 4
      %v291 = vor.u32 %v287, %v290
      %292 = vrot.lane.b32.xlu0 %v283, 125
      %v293 = vpop.permute.xlu0 %292
      %294 = vrot.lane.b32.xlu0 %v291, 125
      %v295 = vpop.permute.xlu0 %294
      %vm296 = vcmask 1022976
      %v297 = vsel %vm296, %v293, %v295
      %vm300 = vcmask 1045508
      %vm301 = vsmask.f32 7954
      %vm302 = vmand %vm300, %vm301
      %v303 = vld [vmem:[#allocation2] sm:$0x30]
      %v304 = vsel %vm302, %v297, %v303
      %305 = vst [vmem:[#allocation2] sm:$0x30] %v304
      %vm306 = vcmask 488452
      %vm307 = vmand %vm306, %vm301
      %v308 = vld [vmem:[#allocation2 + $0x8] sm:$0x30]
      %v309 = vsel %vm307, %v295, %v308
      %310 = vst [vmem:[#allocation2 + $0x8] sm:$0x30] %v309
      %v311 = vld [vmem:[%s165] sm:$0x77]
      %v313 = vcombine.high %v311, %v311
      %v315 = vpack.c.bf16 %v311, %v311
      %v316 = vpack.c.bf16 %v313, %v313
      %v319 = vrot.slane %v315, 2
      %v320 = vrot.slane %v316, 2
      %321 = vrot.lane.b32.xlu0 %v319, 124
      %v322 = vpop.permute.xlu0 %321
      %323 = vrot.lane.b32.xlu0 %v320, 124
      %v324 = vpop.permute.xlu0 %323
      %vm325 = vcmask 1014784
      %v326 = vsel %vm325, %v322, %v324
      %vm329 = vcmask 1047558
      %vm330 = vsmask.f32 7424
      %vm331 = vmand %vm329, %vm330
      %v332 = vld [vmem:[#allocation2] sm:$0xc0]
      %v333 = vsel %vm331, %v326, %v332
      %334 = vst [vmem:[#allocation2] sm:$0xc0] %v333
      %vm335 = vcmask 490502
      %vm336 = vmand %vm335, %vm330
      %v337 = vld [vmem:[#allocation2 + $0x8] sm:$0xc0]
      %v338 = vsel %vm336, %v324, %v337
      %339 = vst [vmem:[#allocation2 + $0x8] sm:$0xc0] %v338
      %v340 = vld [vmem:[%s165] sm:$0x77]
      %v342 = vcombine.high %v340, %v340
      %v344 = vpack.c.bf16 %v340, %v340
      %v345 = vpack.c.bf16 %v342, %v342
      %v347 = vshll.u32 %v344, 16
      %v349 = vrot.slane %v347, 1
      %v351 = vshll.u32 %v345, 16
      %v353 = vrot.slane %v351, 1
      %v354 = vshrl.u32 %v344, 16
      %v356 = vor.u32 %v354, %v349
      %v357 = vshrl.u32 %v345, 16
      %v359 = vor.u32 %v357, %v353
      %360 = vrot.lane.b32.xlu0 %v349, 112
      %v361 = vpop.permute.xlu0 %360
      %362 = vrot.lane.b32.xlu0 %v353, 112
      %v363 = vpop.permute.xlu0 %362
      %364 = vrot.lane.b32.xlu0 %v356, 112
      %v365 = vpop.permute.xlu0 %364
      %366 = vrot.lane.b32.xlu0 %v359, 112
      %v367 = vpop.permute.xlu0 %366
      %vm368 = vcmask 916480
      %v369 = vsel %vm368, %v361, %v363
      %v370 = vsel %vm368, %v365, %v367
      %vm375 = vcmask 1047559
      %vm376 = vsmask.f32 7966
      %vm377 = vmand %vm375, %vm376
      %v378 = vld [vmem:[#allocation2] sm:$0x80]
      %v379 = vsel %vm377, %v369, %v378
      %380 = vst [vmem:[#allocation2] sm:$0x80] %v379
      %vm381 = vcmask 490503
      %vm382 = vmand %vm381, %vm376
      %v383 = vld [vmem:[#allocation2 + $0x8] sm:$0x80]
      %v384 = vsel %vm382, %v363, %v383
      %385 = vst [vmem:[#allocation2 + $0x8] sm:$0x80] %v384
      %386 = vst [vmem:[#allocation2 + $0x10] sm:$0x1] %v370
      %vm387 = vcmask 483328
      %388 = vst.msk [vmem:[#allocation2 + $0x18] sm:$0x1] %vm387, %v367
      %v389 = vld [vmem:[%s165] sm:$0x77]
      %v391 = vcombine.high %v389, %v389
      %v393 = vpack.c.bf16 %v389, %v389
      %v394 = vpack.c.bf16 %v391, %v391
      %v397 = vrot.slane %v393, 7
      %v398 = vrot.slane %v394, 7
      %399 = vrot.lane.b32.xlu0 %v397, 111
      %v400 = vpop.permute.xlu0 %399
      %401 = vrot.lane.b32.xlu0 %v398, 111
      %v402 = vpop.permute.xlu0 %401
      %vm403 = vcmask 908288
      %v404 = vsel %vm403, %v400, %v402
      %vm407 = vsmask.f32 2304
      %vm408 = vmand %vm230, %vm407
      %v409 = vld [vmem:[#allocation2 + $0x10] sm:$0x6]
      %v410 = vsel %vm408, %v404, %v409
      %411 = vst [vmem:[#allocation2 + $0x10] sm:$0x6] %v410
      %vm412 = vmand %vm236, %vm407
      %v413 = vld [vmem:[#allocation2 + $0x18] sm:$0x6]
      %v414 = vsel %vm412, %v402, %v413
      %415 = vst [vmem:[#allocation2 + $0x18] sm:$0x6] %v414
      %v416 = vld [vmem:[%s165] sm:$0x77]
      %v418 = vcombine.high %v416, %v416
      %v420 = vpack.c.bf16 %v416, %v416
      %v421 = vpack.c.bf16 %v418, %v418
      %v423 = vshrl.u32 %v420, 16
      %v425 = vrot.slane %v423, 5
      %v426 = vshll.u32 %v420, 16
      %v428 = vrot.slane %v426, 6
      %v429 = vor.u32 %v425, %v428
      %v431 = vshrl.u32 %v421, 16
      %v433 = vrot.slane %v431, 5
      %v434 = vshll.u32 %v421, 16
      %v436 = vrot.slane %v434, 6
      %v437 = vor.u32 %v433, %v436
      %438 = vrot.lane.b32.xlu0 %v429, 110
      %v439 = vpop.permute.xlu0 %438
      %440 = vrot.lane.b32.xlu0 %v437, 110
      %v441 = vpop.permute.xlu0 %440
      %vm442 = vcmask 900096
      %v443 = vsel %vm442, %v439, %v441
      %vm446 = vcmask 1043458
      %vm447 = vsmask.f32 7946
      %vm448 = vmand %vm446, %vm447
      %v449 = vld [vmem:[#allocation2 + $0x10] sm:$0xc]
      %v450 = vsel %vm448, %v443, %v449
      %451 = vst [vmem:[#allocation2 + $0x10] sm:$0xc] %v450
      %vm452 = vcmask 486402
      %vm453 = vmand %vm452, %vm447
      %v454 = vld [vmem:[#allocation2 + $0x18] sm:$0xc]
      %v455 = vsel %vm453, %v441, %v454
      %456 = vst [vmem:[#allocation2 + $0x18] sm:$0xc] %v455
      %v457 = vld [vmem:[%s165] sm:$0x77]
      %v459 = vcombine.high %v457, %v457
      %v461 = vpack.c.bf16 %v457, %v457
      %v462 = vpack.c.bf16 %v459, %v459
      %v465 = vrot.slane %v461, 4
      %v466 = vrot.slane %v462, 4
      %467 = vrot.lane.b32.xlu0 %v465, 109
      %v468 = vpop.permute.xlu0 %467
      %469 = vrot.lane.b32.xlu0 %v466, 109
      %v470 = vpop.permute.xlu0 %469
      %vm471 = vcmask 891904
      %v472 = vsel %vm471, %v468, %v470
      %vm475 = vsmask.f32 5376
      %vm476 = vmand %vm300, %vm475
      %v477 = vld [vmem:[#allocation2 + $0x10] sm:$0x30]
      %v478 = vsel %vm476, %v472, %v477
      %479 = vst [vmem:[#allocation2 + $0x10] sm:$0x30] %v478
      %vm480 = vmand %vm306, %vm475
      %v481 = vld [vmem:[#allocation2 + $0x18] sm:$0x30]
      %v482 = vsel %vm480, %v470, %v481
      %483 = vst [vmem:[#allocation2 + $0x18] sm:$0x30] %v482
      %v484 = vld [vmem:[%s165] sm:$0x77]
      %v486 = vcombine.high %v484, %v484
      %v488 = vpack.c.bf16 %v484, %v484
      %v489 = vpack.c.bf16 %v486, %v486
      %v491 = vshrl.u32 %v488, 16
      %v493 = vrot.slane %v491, 2
      %v494 = vshll.u32 %v488, 16
      %v496 = vrot.slane %v494, 3
      %v497 = vor.u32 %v493, %v496
      %v499 = vshrl.u32 %v489, 16
      %v501 = vrot.slane %v499, 2
      %v502 = vshll.u32 %v489, 16
      %v504 = vrot.slane %v502, 3
      %v505 = vor.u32 %v501, %v504
      %506 = vrot.lane.b32.xlu0 %v497, 108
      %v507 = vpop.permute.xlu0 %506
      %508 = vrot.lane.b32.xlu0 %v505, 108
      %v509 = vpop.permute.xlu0 %508
      %vm510 = vcmask 883712
      %v511 = vsel %vm510, %v507, %v509
      %vm514 = vcmask 1046533
      %vm515 = vmand %vm514, %vm173
      %v516 = vld [vmem:[#allocation2 + $0x10] sm:$0x60]
      %v517 = vsel %vm515, %v511, %v516
      %518 = vst [vmem:[#allocation2 + $0x10] sm:$0x60] %v517
      %vm519 = vcmask 489477
      %vm520 = vmand %vm519, %vm173
      %v521 = vld [vmem:[#allocation2 + $0x18] sm:$0x60]
      %v522 = vsel %vm520, %v509, %v521
      %523 = vst [vmem:[#allocation2 + $0x18] sm:$0x60] %v522
      %v524 = vld [vmem:[%s165] sm:$0x77]
      %v526 = vcombine.high %v524, %v524
      %v528 = vpack.c.bf16 %v524, %v524
      %v529 = vpack.c.bf16 %v526, %v526
      %v532 = vrot.slane %v528, 1
      %v533 = vrot.slane %v529, 1
      %534 = vrot.lane.b32.xlu0 %v532, 96
      %v535 = vpop.permute.xlu0 %534
      %536 = vrot.lane.b32.xlu0 %v533, 96
      %v537 = vpop.permute.xlu0 %536
      %vm538 = vcmask 785408
      %v539 = vsel %vm538, %v535, %v537
      %542 = vst [vmem:[#allocation2 + $0x10] sm:$0x80] %v539
      %vm543 = vcmask 490503
      %544 = vst.msk [vmem:[#allocation2 + $0x18] sm:$0x80] %vm543, %v537
      %vm545 = vcmask 1040384
      %vm546 = vsmask.f32 256
      %vm547 = vmand %vm545, %vm546
      %v548 = vld [vmem:[#allocation2 + $0x20] sm:$0x1]
      %v549 = vsel %vm547, %v539, %v548
      %550 = vst [vmem:[#allocation2 + $0x20] sm:$0x1] %v549
      %vm551 = vcmask 483328
      %vm552 = vmand %vm551, %vm546
      %v553 = vld [vmem:[#allocation2 + $0x28] sm:$0x1]
      %v554 = vsel %vm552, %v537, %v553
      %555 = vst [vmem:[#allocation2 + $0x28] sm:$0x1] %v554
      %v556 = vld [vmem:[%s165] sm:$0x77]
      %v558 = vcombine.high %v556, %v556
      %v560 = vpack.c.bf16 %v556, %v556
      %v561 = vpack.c.bf16 %v558, %v558
      %v563 = vshrl.u32 %v560, 16
      %v565 = vrot.slane %v563, 7
      %v566 = vshll.u32 %v560, 16
      %v568 = vor.u32 %v565, %v566
      %v570 = vshrl.u32 %v561, 16
      %v572 = vrot.slane %v570, 7
      %v573 = vshll.u32 %v561, 16
      %v575 = vor.u32 %v572, %v573
      %576 = vrot.lane.b32.xlu0 %v568, 95
      %v577 = vpop.permute.xlu0 %576
      %578 = vrot.lane.b32.xlu0 %v575, 95
      %v579 = vpop.permute.xlu0 %578
      %vm580 = vcmask 777216
      %v581 = vsel %vm580, %v577, %v579
      %vm584 = vsmask.f32 7938
      %vm585 = vmand %vm189, %vm584
      %v586 = vld [vmem:[#allocation2 + $0x20] sm:$0x3]
      %v587 = vsel %vm585, %v581, %v586
      %588 = vst [vmem:[#allocation2 + $0x20] sm:$0x3] %v587
      %vm589 = vmand %vm195, %vm584
      %v590 = vld [vmem:[#allocation2 + $0x28] sm:$0x3]
      %v591 = vsel %vm589, %v579, %v590
      %592 = vst [vmem:[#allocation2 + $0x28] sm:$0x3] %v591
      %v593 = vld [vmem:[%s165] sm:$0x77]
      %v595 = vcombine.high %v593, %v593
      %v597 = vpack.c.bf16 %v593, %v593
      %v598 = vpack.c.bf16 %v595, %v595
      %v601 = vrot.slane %v597, 6
      %v602 = vrot.slane %v598, 6
      %603 = vrot.lane.b32.xlu0 %v601, 94
      %v604 = vpop.permute.xlu0 %603
      %605 = vrot.lane.b32.xlu0 %v602, 94
      %v606 = vpop.permute.xlu0 %605
      %vm607 = vcmask 769024
      %v608 = vsel %vm607, %v604, %v606
      %vm611 = vsmask.f32 3328
      %vm612 = vmand %vm446, %vm611
      %v613 = vld [vmem:[#allocation2 + $0x20] sm:$0xc]
      %v614 = vsel %vm612, %v608, %v613
      %615 = vst [vmem:[#allocation2 + $0x20] sm:$0xc] %v614
      %vm616 = vmand %vm452, %vm611
      %v617 = vld [vmem:[#allocation2 + $0x28] sm:$0xc]
      %v618 = vsel %vm616, %v606, %v617
      %619 = vst [vmem:[#allocation2 + $0x28] sm:$0xc] %v618
      %v620 = vld [vmem:[%s165] sm:$0x77]
      %v622 = vcombine.high %v620, %v620
      %v624 = vpack.c.bf16 %v620, %v620
      %v625 = vpack.c.bf16 %v622, %v622
      %v627 = vshrl.u32 %v624, 16
      %v629 = vrot.slane %v627, 4
      %v630 = vshll.u32 %v624, 16
      %v632 = vrot.slane %v630, 5
      %v633 = vor.u32 %v629, %v632
      %v635 = vshrl.u32 %v625, 16
      %v637 = vrot.slane %v635, 4
      %v638 = vshll.u32 %v625, 16
      %v640 = vrot.slane %v638, 5
      %v641 = vor.u32 %v637, %v640
      %642 = vrot.lane.b32.xlu0 %v633, 93
      %v643 = vpop.permute.xlu0 %642
      %644 = vrot.lane.b32.xlu0 %v641, 93
      %v645 = vpop.permute.xlu0 %644
      %vm646 = vcmask 760832
      %v647 = vsel %vm646, %v643, %v645
      %vm650 = vsmask.f32 7950
      %vm651 = vmand %vm259, %vm650
      %v652 = vld [vmem:[#allocation2 + $0x20] sm:$0x18]
      %v653 = vsel %vm651, %v647, %v652
      %654 = vst [vmem:[#allocation2 + $0x20] sm:$0x18] %v653
      %vm655 = vmand %vm265, %vm650
      %v656 = vld [vmem:[#allocation2 + $0x28] sm:$0x18]
      %v657 = vsel %vm655, %v645, %v656
      %658 = vst [vmem:[#allocation2 + $0x28] sm:$0x18] %v657
      %v659 = vld [vmem:[%s165] sm:$0x77]
      %v661 = vcombine.high %v659, %v659
      %v663 = vpack.c.bf16 %v659, %v659
      %v664 = vpack.c.bf16 %v661, %v661
      %v667 = vrot.slane %v663, 3
      %v668 = vrot.slane %v664, 3
      %669 = vrot.lane.b32.xlu0 %v667, 92
      %v670 = vpop.permute.xlu0 %669
      %671 = vrot.lane.b32.xlu0 %v668, 92
      %v672 = vpop.permute.xlu0 %671
      %vm673 = vcmask 752640
      %v674 = vsel %vm673, %v670, %v672
      %vm677 = vsmask.f32 6400
      %vm678 = vmand %vm514, %vm677
      %v679 = vld [vmem:[#allocation2 + $0x20] sm:$0x60]
      %v680 = vsel %vm678, %v674, %v679
      %681 = vst [vmem:[#allocation2 + $0x20] sm:$0x60] %v680
      %vm682 = vmand %vm519, %vm677
      %v683 = vld [vmem:[#allocation2 + $0x28] sm:$0x60]
      %v684 = vsel %vm682, %v672, %v683
      %685 = vst [vmem:[#allocation2 + $0x28] sm:$0x60] %v684
      %v686 = vld [vmem:[%s165] sm:$0x77]
      %v688 = vcombine.high %v686, %v686
      %v690 = vpack.c.bf16 %v686, %v686
      %v691 = vpack.c.bf16 %v688, %v688
      %v693 = vshrl.u32 %v690, 16
      %v695 = vrot.slane %v693, 1
      %v696 = vshll.u32 %v690, 16
      %v698 = vrot.slane %v696, 2
      %v699 = vor.u32 %v695, %v698
      %v701 = vshrl.u32 %v691, 16
      %v703 = vrot.slane %v701, 1
      %v704 = vshll.u32 %v691, 16
      %v706 = vrot.slane %v704, 2
      %v707 = vor.u32 %v703, %v706
      %708 = vrot.lane.b32.xlu0 %v699, 80
      %v709 = vpop.permute.xlu0 %708
      %710 = vrot.lane.b32.xlu0 %v707, 80
      %v711 = vpop.permute.xlu0 %710
      %vm712 = vcmask 654336
      %v713 = vsel %vm712, %v709, %v711
      %vm716 = vsmask.f32 7962
      %vm717 = vmand %vm329, %vm716
      %v718 = vld [vmem:[#allocation2 + $0x20] sm:$0xc0]
      %v719 = vsel %vm717, %v713, %v718
      %720 = vst [vmem:[#allocation2 + $0x20] sm:$0xc0] %v719
      %vm721 = vmand %vm335, %vm716
      %v722 = vld [vmem:[#allocation2 + $0x28] sm:$0xc0]
      %v723 = vsel %vm721, %v711, %v722
      %724 = vst [vmem:[#allocation2 + $0x28] sm:$0xc0] %v723
      %v725 = vld [vmem:[%s165] sm:$0x77]
      %v727 = vcombine.high %v725, %v725
      %v729 = vpack.c.bf16 %v725, %v725
      %v730 = vpack.c.bf16 %v727, %v727
      %733 = vrot.lane.b32.xlu0 %v729, 79
      %v734 = vpop.permute.xlu0 %733
      %735 = vrot.lane.b32.xlu0 %v730, 79
      %v736 = vpop.permute.xlu0 %735
      %vm737 = vcmask 646144
      %v738 = vsel %vm737, %v734, %v736
      %v741 = vld [vmem:[#allocation2 + $0x30] sm:$0x3]
      %v742 = vsel %vm191, %v738, %v741
      %743 = vst [vmem:[#allocation2 + $0x30] sm:$0x3] %v742
      %v744 = vld [vmem:[#allocation2 + $0x38] sm:$0x3]
      %v745 = vsel %vm196, %v736, %v744
      %746 = vst [vmem:[#allocation2 + $0x38] sm:$0x3] %v745
      %v747 = vld [vmem:[%s165] sm:$0x77]
      %v749 = vcombine.high %v747, %v747
      %v751 = vpack.c.bf16 %v747, %v747
      %v752 = vpack.c.bf16 %v749, %v749
      %v754 = vshrl.u32 %v751, 16
      %v756 = vrot.slane %v754, 6
      %v757 = vshll.u32 %v751, 16
      %v759 = vrot.slane %v757, 7
      %v760 = vor.u32 %v756, %v759
      %v762 = vshrl.u32 %v752, 16
      %v764 = vrot.slane %v762, 6
      %v765 = vshll.u32 %v752, 16
      %v767 = vrot.slane %v765, 7
      %v768 = vor.u32 %v764, %v767
      %769 = vrot.lane.b32.xlu0 %v760, 78
      %v770 = vpop.permute.xlu0 %769
      %771 = vrot.lane.b32.xlu0 %v768, 78
      %v772 = vpop.permute.xlu0 %771
      %vm773 = vcmask 637952
      %v774 = vsel %vm773, %v770, %v772
      %v777 = vld [vmem:[#allocation2 + $0x30] sm:$0x6]
      %v778 = vsel %vm232, %v774, %v777
      %779 = vst [vmem:[#allocation2 + $0x30] sm:$0x6] %v778
      %v780 = vld [vmem:[#allocation2 + $0x38] sm:$0x6]
      %v781 = vsel %vm237, %v772, %v780
      %782 = vst [vmem:[#allocation2 + $0x38] sm:$0x6] %v781
      %v783 = vld [vmem:[%s165] sm:$0x77]
      %v785 = vcombine.high %v783, %v783
      %v787 = vpack.c.bf16 %v783, %v783
      %v788 = vpack.c.bf16 %v785, %v785
      %v791 = vrot.slane %v787, 5
      %v792 = vrot.slane %v788, 5
      %793 = vrot.lane.b32.xlu0 %v791, 77
      %v794 = vpop.permute.xlu0 %793
      %795 = vrot.lane.b32.xlu0 %v792, 77
      %v796 = vpop.permute.xlu0 %795
      %vm797 = vcmask 629760
      %v798 = vsel %vm797, %v794, %v796
      %v801 = vld [vmem:[#allocation2 + $0x30] sm:$0x18]
      %v802 = vsel %vm261, %v798, %v801
      %803 = vst [vmem:[#allocation2 + $0x30] sm:$0x18] %v802
      %v804 = vld [vmem:[#allocation2 + $0x38] sm:$0x18]
      %v805 = vsel %vm266, %v796, %v804
      %806 = vst [vmem:[#allocation2 + $0x38] sm:$0x18] %v805
      %v807 = vld [vmem:[%s165] sm:$0x77]
      %v809 = vcombine.high %v807, %v807
      %v811 = vpack.c.bf16 %v807, %v807
      %v812 = vpack.c.bf16 %v809, %v809
      %v814 = vshrl.u32 %v811, 16
      %v816 = vrot.slane %v814, 3
      %v817 = vshll.u32 %v811, 16
      %v819 = vrot.slane %v817, 4
      %v820 = vor.u32 %v816, %v819
      %v822 = vshrl.u32 %v812, 16
      %v824 = vrot.slane %v822, 3
      %v825 = vshll.u32 %v812, 16
      %v827 = vrot.slane %v825, 4
      %v828 = vor.u32 %v824, %v827
      %829 = vrot.lane.b32.xlu0 %v820, 76
      %v830 = vpop.permute.xlu0 %829
      %831 = vrot.lane.b32.xlu0 %v828, 76
      %v832 = vpop.permute.xlu0 %831
      %vm833 = vcmask 621568
      %v834 = vsel %vm833, %v830, %v832
      %v837 = vld [vmem:[#allocation2 + $0x30] sm:$0x30]
      %v838 = vsel %vm302, %v834, %v837
      %839 = vst [vmem:[#allocation2 + $0x30] sm:$0x30] %v838
      %v840 = vld [vmem:[#allocation2 + $0x38] sm:$0x30]
      %v841 = vsel %vm307, %v832, %v840
      %842 = vst [vmem:[#allocation2 + $0x38] sm:$0x30] %v841
      %v843 = vld [vmem:[%s165] sm:$0x77]
      %v845 = vcombine.high %v843, %v843
      %v847 = vpack.c.bf16 %v843, %v843
      %v848 = vpack.c.bf16 %v845, %v845
      %v851 = vrot.slane %v847, 2
      %v852 = vrot.slane %v848, 2
      %853 = vrot.lane.b32.xlu0 %v851, 64
      %v854 = vpop.permute.xlu0 %853
      %855 = vrot.lane.b32.xlu0 %v852, 64
      %v856 = vpop.permute.xlu0 %855
      %vm857 = vcmask 523264
      %v858 = vsel %vm857, %v854, %v856
      %v861 = vld [vmem:[#allocation2 + $0x30] sm:$0xc0]
      %v862 = vsel %vm331, %v858, %v861
      %863 = vst [vmem:[#allocation2 + $0x30] sm:$0xc0] %v862
      %v864 = vld [vmem:[#allocation2 + $0x38] sm:$0xc0]
      %v865 = vsel %vm336, %v856, %v864
      %866 = vst [vmem:[#allocation2 + $0x38] sm:$0xc0] %v865
      %v867 = vld [vmem:[%s165] sm:$0x77]
      %v869 = vcombine.high %v867, %v867
      %v871 = vpack.c.bf16 %v867, %v867
      %v872 = vpack.c.bf16 %v869, %v869
      %v874 = vshll.u32 %v871, 16
      %v876 = vrot.slane %v874, 1
      %v878 = vshll.u32 %v872, 16
      %v880 = vrot.slane %v878, 1
      %v881 = vshrl.u32 %v871, 16
      %v883 = vor.u32 %v881, %v876
      %v884 = vshrl.u32 %v872, 16
      %v886 = vor.u32 %v884, %v880
      %887 = vrot.lane.b32.xlu0 %v876, 63
      %v888 = vpop.permute.xlu0 %887
      %889 = vrot.lane.b32.xlu0 %v880, 63
      %v890 = vpop.permute.xlu0 %889
      %891 = vrot.lane.b32.xlu0 %v883, 63
      %v892 = vpop.permute.xlu0 %891
      %893 = vrot.lane.b32.xlu0 %v886, 63
      %v894 = vpop.permute.xlu0 %893
      %vm895 = vcmask 515072
      %v896 = vsel %vm895, %v888, %v890
      %v897 = vsel %vm895, %v892, %v894
      %v902 = vld [vmem:[#allocation2 + $0x30] sm:$0x80]
      %v903 = vsel %vm377, %v896, %v902
      %904 = vst [vmem:[#allocation2 + $0x30] sm:$0x80] %v903
      %v905 = vld [vmem:[#allocation2 + $0x38] sm:$0x80]
      %v906 = vsel %vm382, %v890, %v905
      %907 = vst [vmem:[#allocation2 + $0x38] sm:$0x80] %v906
      %908 = vst [vmem:[#allocation2 + $0x40] sm:$0x1] %v897
      %909 = vst.msk [vmem:[#allocation2 + $0x48] sm:$0x1] %vm387, %v894
      %v910 = vld [vmem:[%s165] sm:$0x77]
      %v912 = vcombine.high %v910, %v910
      %v914 = vpack.c.bf16 %v910, %v910
      %v915 = vpack.c.bf16 %v912, %v912
      %v918 = vrot.slane %v914, 7
      %v919 = vrot.slane %v915, 7
      %920 = vrot.lane.b32.xlu0 %v918, 62
      %v921 = vpop.permute.xlu0 %920
      %922 = vrot.lane.b32.xlu0 %v919, 62
      %v923 = vpop.permute.xlu0 %922
      %vm924 = vcmask 506880
      %v925 = vsel %vm924, %v921, %v923
      %v928 = vld [vmem:[#allocation2 + $0x40] sm:$0x6]
      %v929 = vsel %vm408, %v925, %v928
      %930 = vst [vmem:[#allocation2 + $0x40] sm:$0x6] %v929
      %v931 = vld [vmem:[#allocation2 + $0x48] sm:$0x6]
      %v932 = vsel %vm412, %v923, %v931
      %933 = vst [vmem:[#allocation2 + $0x48] sm:$0x6] %v932
      %v934 = vld [vmem:[%s165] sm:$0x77]
      %v936 = vcombine.high %v934, %v934
      %v938 = vpack.c.bf16 %v934, %v934
      %v939 = vpack.c.bf16 %v936, %v936
      %v941 = vshrl.u32 %v938, 16
      %v943 = vrot.slane %v941, 5
      %v944 = vshll.u32 %v938, 16
      %v946 = vrot.slane %v944, 6
      %v947 = vor.u32 %v943, %v946
      %v949 = vshrl.u32 %v939, 16
      %v951 = vrot.slane %v949, 5
      %v952 = vshll.u32 %v939, 16
      %v954 = vrot.slane %v952, 6
      %v955 = vor.u32 %v951, %v954
      %956 = vrot.lane.b32.xlu0 %v947, 61
      %v957 = vpop.permute.xlu0 %956
      %958 = vrot.lane.b32.xlu0 %v955, 61
      %v959 = vpop.permute.xlu0 %958
      %vm960 = vcmask 498688
      %v961 = vsel %vm960, %v957, %v959
      %v964 = vld [vmem:[#allocation2 + $0x40] sm:$0xc]
      %v965 = vsel %vm448, %v961, %v964
      %966 = vst [vmem:[#allocation2 + $0x40] sm:$0xc] %v965
      %v967 = vld [vmem:[#allocation2 + $0x48] sm:$0xc]
      %v968 = vsel %vm453, %v959, %v967
      %969 = vst [vmem:[#allocation2 + $0x48] sm:$0xc] %v968
      %v970 = vld [vmem:[%s165] sm:$0x77]
      %v972 = vcombine.high %v970, %v970
      %v974 = vpack.c.bf16 %v970, %v970
      %v975 = vpack.c.bf16 %v972, %v972
      %v978 = vrot.slane %v974, 4
      %v979 = vrot.slane %v975, 4
      %980 = vrot.lane.b32.xlu0 %v978, 60
      %v981 = vpop.permute.xlu0 %980
      %982 = vrot.lane.b32.xlu0 %v979, 60
      %v983 = vpop.permute.xlu0 %982
      %vm984 = vcmask 490496
      %v985 = vsel %vm984, %v981, %v983
      %v988 = vld [vmem:[#allocation2 + $0x40] sm:$0x30]
      %v989 = vsel %vm476, %v985, %v988
      %990 = vst [vmem:[#allocation2 + $0x40] sm:$0x30] %v989
      %v991 = vld [vmem:[#allocation2 + $0x48] sm:$0x30]
      %v992 = vsel %vm480, %v983, %v991
      %993 = vst [vmem:[#allocation2 + $0x48] sm:$0x30] %v992
      %v994 = vld [vmem:[%s1] sm:$0xf]
      %v995 = vld [vmem:[%s1 + $0x4] sm:$0xf]
      %v996 = vld [vmem:[#allocation2] sm:$0xff]
      %v997 = vld [vmem:[#allocation2 + $0x8] sm:$0xff]
      %v998 = vld [vmem:[#allocation2 + $0x10] sm:$0xff]
      %v999 = vld [vmem:[#allocation2 + $0x18] sm:$0xff]
      %v1000 = vld [vmem:[#allocation2 + $0x20] sm:$0xff]
      %v1001 = vld [vmem:[#allocation2 + $0x28] sm:$0xff]
      %v1002 = vld [vmem:[#allocation2 + $0x30] sm:$0xff]
      %v1003 = vld [vmem:[#allocation2 + $0x38] sm:$0xff]
      %v1004 = vld [vmem:[#allocation2 + $0x40] sm:$0xff]
      %v1005 = vld [vmem:[#allocation2 + $0x48] sm:$0xff]
      %v1006 = vld [vmem:[%s2] sm:$0xff]
      %v1007 = vld [vmem:[%s2 + $0x8] sm:$0xff]
      %1009 = vset.pattern.permute.xlu0 0
      %1010 = vperm.xlu0 %1009, %v1006
      %v1011 = vpop.permute.xlu0 %1010
      %1014 = vset.pattern.permute.xlu0 0
      %1015 = vperm.xlu0 %1014, %v1007
      %v1016 = vpop.permute.xlu0 %1015
      %v1020 = vunpack.c.l.b16 %v994
      %v1021 = vunpack.c.l.b16 %v995
      %v1022 = vpack.c.b16 %v1021, %v1020
      %vm1023 = vcmask 654336
      %v1025 = vsel %vm1023, %v1022, 0
      %1027 = vmatprep.subr.bf16.mxu0 %v997
      %1028 = vmatpush1.bf16.msra.mxu0 %v996
      %1029 = vmatprep.subr.bf16.mxu0 %v999
      %1030 = vmatpush1.bf16.msra.mxu0 %v998
      %1031 = vmatprep.subr.bf16.mxu0 %v1001
      %1032 = vmatpush1.bf16.msra.mxu0 %v1000
      %1033 = vmatprep.subr.bf16.mxu0 %v1003
      %1034 = vmatpush1.bf16.msra.mxu0 %v1002
      %1035 = vmatprep.subr.bf16.mxu0 %v1005
      %1036 = vmatpush1.bf16.msra.mxu0 %v1004
      %1037 = vmatprep.subr.bf16.mxu0 0
      %1038 = vmatpush1.bf16.msra.mxu0 0
      %1039 = vmatprep.subr.bf16.mxu0 0
      %1040 = vmatpush1.bf16.msra.mxu0 0
      %1041 = vmatprep.subr.bf16.mxu0 0
      %1042 = vmatpush1.bf16.msra.mxu0 0
      %1043 = vmatprep.subr.bf16.mxu0 0
      %1044 = vmatpush1.bf16.msra.mxu0 0
      %1045 = vmatprep.subr.bf16.mxu0 0
      %1046 = vmatpush1.bf16.msra.mxu0 0
      %1047 = vmatprep.subr.bf16.mxu0 0
      %1048 = vmatpush1.bf16.msra.mxu0 0
      %1049 = vmatprep.subr.bf16.mxu0 0
      %1050 = vmatpush1.bf16.msra.mxu0 0
      %1051 = vmatprep.subr.bf16.mxu0 0
      %1052 = vmatpush1.bf16.msra.mxu0 0
      %1053 = vmatprep.subr.bf16.mxu0 0
      %1054 = vmatpush1.bf16.msra.mxu0 0
      %1055 = vmatprep.subr.bf16.mxu0 0
      %1056 = vmatpush1.bf16.msra.mxu0 0
      %1057 = vmatprep.subr.bf16.mxu0 0
      %1058 = vmatpush1.bf16.msra.mxu0 0
      %1059 = vmatprep.mubr.bf16.mxu0 0
      %1060 = vmatmul.mubr.bf16.gmra.mrb[0].mxu0 %v1025
      %v1061 = vpop.f32.mrb[0].mxu0
      %v1062 = vadd.f32 %v1011, %v1061
      %v1063 = vpop.f32.mrb[0].mxu0
      %v1064 = vadd.f32 %v1011, %v1063
      %v1065 = vpop.f32.mrb[0].mxu0
      %v1066 = vadd.f32 %v1016, %v1065
      %v1067 = vpop.f32.mrb[0].mxu0
      %v1068 = vadd.f32 %v1016, %v1067
      %1069 = vdwg.mxu0
      %v1072 = vcombine.high %v1062, %v1062
      %v1074 = vunpack.c.l.s4 1966171168
      %v1075 = vunpack.c.0.s8 %v1074
      %v1076 = vlaneseq
      %v1077 = vshrl.u32 %v1076, 7
      %v1078 = vsub.s32 %v1075, %v1077
      %v1079 = vrot.slane %v1062, %v1078
      %v1081 = vunpack.c.l.s4 1966171168
      %v1082 = vunpack.c.0.s8 %v1081
      %v1083 = vlaneseq
      %v1084 = vshrl.u32 %v1083, 7
      %v1085 = vsub.s32 %v1082, %v1084
      %v1086 = vrot.slane %v1072, %v1085
      %v1087 = vcombine.high %v1079, %v1079
      %v1088 = vcombine.high %v1086, %v1086
      %v1090 = vunpack.c.l.s4 1966171168
      %v1091 = vunpack.c.0.s8 %v1090
      %v1092 = vlaneseq
      %v1093 = vshrl.u32 %v1092, 7
      %v1094 = vsub.s32 %v1091, %v1093
      %v1095 = vrot.slane %v1079, %v1094
      %v1097 = vunpack.c.l.s4 1966171168
      %v1098 = vunpack.c.0.s8 %v1097
      %v1099 = vlaneseq
      %v1100 = vshrl.u32 %v1099, 7
      %v1101 = vsub.s32 %v1098, %v1100
      %v1102 = vrot.slane %v1086, %v1101
      %v1104 = vunpack.c.l.s4 1966171168
      %v1105 = vunpack.c.0.s8 %v1104
      %v1106 = vlaneseq
      %v1107 = vshrl.u32 %v1106, 7
      %v1108 = vsub.s32 %v1105, %v1107
      %v1109 = vrot.slane %v1087, %v1108
      %v1111 = vunpack.c.l.s4 1966171168
      %v1112 = vunpack.c.0.s8 %v1111
      %v1113 = vlaneseq
      %v1114 = vshrl.u32 %v1113, 7
      %v1115 = vsub.s32 %v1112, %v1114
      %v1116 = vrot.slane %v1088, %v1115
      %v1117 = vcombine.high %v1095, %v1095
      %v1118 = vcombine.high %v1102, %v1102
      %v1119 = vcombine.high %v1109, %v1109
      %v1120 = vcombine.high %v1116, %v1116
      %v1121 = vcombine.high %v1066, %v1066
      %v1123 = vunpack.c.l.s4 1966171168
      %v1124 = vunpack.c.0.s8 %v1123
      %v1125 = vlaneseq
      %v1126 = vshrl.u32 %v1125, 7
      %v1127 = vsub.s32 %v1124, %v1126
      %v1128 = vrot.slane %v1066, %v1127
      %v1130 = vunpack.c.l.s4 1966171168
      %v1131 = vunpack.c.0.s8 %v1130
      %v1132 = vlaneseq
      %v1133 = vshrl.u32 %v1132, 7
      %v1134 = vsub.s32 %v1131, %v1133
      %v1135 = vrot.slane %v1121, %v1134
      %v1136 = vcombine.high %v1128, %v1128
      %v1137 = vcombine.high %v1135, %v1135
      %v1139 = vunpack.c.l.s4 1966171168
      %v1140 = vunpack.c.0.s8 %v1139
      %v1141 = vlaneseq
      %v1142 = vshrl.u32 %v1141, 7
      %v1143 = vsub.s32 %v1140, %v1142
      %v1144 = vrot.slane %v1128, %v1143
      %v1146 = vunpack.c.l.s4 1966171168
      %v1147 = vunpack.c.0.s8 %v1146
      %v1148 = vlaneseq
      %v1149 = vshrl.u32 %v1148, 7
      %v1150 = vsub.s32 %v1147, %v1149
      %v1151 = vrot.slane %v1135, %v1150
      %v1153 = vunpack.c.l.s4 1966171168
      %v1154 = vunpack.c.0.s8 %v1153
      %v1155 = vlaneseq
      %v1156 = vshrl.u32 %v1155, 7
      %v1157 = vsub.s32 %v1154, %v1156
      %v1158 = vrot.slane %v1136, %v1157
      %v1160 = vunpack.c.l.s4 1966171168
      %v1161 = vunpack.c.0.s8 %v1160
      %v1162 = vlaneseq
      %v1163 = vshrl.u32 %v1162, 7
      %v1164 = vsub.s32 %v1161, %v1163
      %v1165 = vrot.slane %v1137, %v1164
      %v1166 = vcombine.high %v1144, %v1144
      %v1167 = vcombine.high %v1151, %v1151
      %v1168 = vcombine.high %v1158, %v1158
      %v1169 = vcombine.high %v1165, %v1165
      %vm1186 = vcmask 90112
      %1187 = vst.msk [vmem:[%s170] sm:$0x1] %vm1186, %v1095
      %1188 = vst.msk [vmem:[%s170 + $0x10] sm:$0x1] %vm1186, %v1109
      %1189 = vst.msk [vmem:[%s170 + $0x20] sm:$0x1] %vm1186, %v1117
      %1190 = vst.msk [vmem:[%s170 + $0x30] sm:$0x1] %vm1186, %v1119
      %1191 = vst.msk [vmem:[%s170 + $0x40] sm:$0x1] %vm1186, %v1102
      %1192 = vst.msk [vmem:[%s170 + $0x50] sm:$0x1] %vm1186, %v1116
      %1193 = vst.msk [vmem:[%s170 + $0x60] sm:$0x1] %vm1186, %v1118
      %1194 = vst.msk [vmem:[%s170 + $0x70] sm:$0x1] %vm1186, %v1120
      %1195 = vst.msk [vmem:[%s170 + $0x80] sm:$0x1] %vm1186, %v1144
      %1196 = vst.msk [vmem:[%s170 + $0x90] sm:$0x1] %vm1186, %v1158
      %1197 = vst.msk [vmem:[%s170 + $0xa0] sm:$0x1] %vm1186, %v1166
      %1198 = vst.msk [vmem:[%s170 + $0xb0] sm:$0x1] %vm1186, %v1168
      %1199 = vst.msk [vmem:[%s170 + $0xc0] sm:$0x1] %vm1186, %v1151
      %1200 = vst.msk [vmem:[%s170 + $0xd0] sm:$0x1] %vm1186, %v1165
      %1201 = vst.msk [vmem:[%s170 + $0xe0] sm:$0x1] %vm1186, %v1167
      %1202 = vst.msk [vmem:[%s170 + $0xf0] sm:$0x1] %vm1186, %v1169
      %v1203 = vlaneseq
      %v1204 = vshrl.u32 %v1203, 7
      %v1205 = vsub.s32 0, %v1204
      %v1206 = vrot.slane %v1095, %v1205
      %v1207 = vlaneseq
      %v1208 = vshrl.u32 %v1207, 7
      %v1209 = vsub.s32 0, %v1208
      %v1210 = vrot.slane %v1109, %v1209
      %v1211 = vlaneseq
      %v1212 = vshrl.u32 %v1211, 7
      %v1213 = vsub.s32 0, %v1212
      %v1214 = vrot.slane %v1117, %v1213
      %v1215 = vlaneseq
      %v1216 = vshrl.u32 %v1215, 7
      %v1217 = vsub.s32 0, %v1216
      %v1218 = vrot.slane %v1119, %v1217
      %v1219 = vlaneseq
      %v1220 = vshrl.u32 %v1219, 7
      %v1221 = vsub.s32 0, %v1220
      %v1222 = vrot.slane %v1102, %v1221
      %v1223 = vlaneseq
      %v1224 = vshrl.u32 %v1223, 7
      %v1225 = vsub.s32 0, %v1224
      %v1226 = vrot.slane %v1116, %v1225
      %v1227 = vlaneseq
      %v1228 = vshrl.u32 %v1227, 7
      %v1229 = vsub.s32 0, %v1228
      %v1230 = vrot.slane %v1118, %v1229
      %v1231 = vlaneseq
      %v1232 = vshrl.u32 %v1231, 7
      %v1233 = vsub.s32 0, %v1232
      %v1234 = vrot.slane %v1120, %v1233
      %v1235 = vlaneseq
      %v1236 = vshrl.u32 %v1235, 7
      %v1237 = vsub.s32 0, %v1236
      %v1238 = vrot.slane %v1144, %v1237
      %v1239 = vlaneseq
      %v1240 = vshrl.u32 %v1239, 7
      %v1241 = vsub.s32 0, %v1240
      %v1242 = vrot.slane %v1158, %v1241
      %v1243 = vlaneseq
      %v1244 = vshrl.u32 %v1243, 7
      %v1245 = vsub.s32 0, %v1244
      %v1246 = vrot.slane %v1166, %v1245
      %v1247 = vlaneseq
      %v1248 = vshrl.u32 %v1247, 7
      %v1249 = vsub.s32 0, %v1248
      %v1250 = vrot.slane %v1168, %v1249
      %v1251 = vlaneseq
      %v1252 = vshrl.u32 %v1251, 7
      %v1253 = vsub.s32 0, %v1252
      %v1254 = vrot.slane %v1151, %v1253
      %v1255 = vlaneseq
      %v1256 = vshrl.u32 %v1255, 7
      %v1257 = vsub.s32 0, %v1256
      %v1258 = vrot.slane %v1165, %v1257
      %v1259 = vlaneseq
      %v1260 = vshrl.u32 %v1259, 7
      %v1261 = vsub.s32 0, %v1260
      %v1262 = vrot.slane %v1167, %v1261
      %v1263 = vlaneseq
      %v1264 = vshrl.u32 %v1263, 7
      %v1265 = vsub.s32 0, %v1264
      %v1266 = vrot.slane %v1169, %v1265
      %1267 = vrot.lane.b32.xlu0 %v1206, 112
      %v1268 = vpop.permute.xlu0 %1267
      %1269 = vrot.lane.b32.xlu0 %v1210, 112
      %v1270 = vpop.permute.xlu0 %1269
      %1271 = vrot.lane.b32.xlu0 %v1214, 112
      %v1272 = vpop.permute.xlu0 %1271
      %1273 = vrot.lane.b32.xlu0 %v1218, 112
      %v1274 = vpop.permute.xlu0 %1273
      %1275 = vrot.lane.b32.xlu0 %v1222, 112
      %v1276 = vpop.permute.xlu0 %1275
      %1277 = vrot.lane.b32.xlu0 %v1226, 112
      %v1278 = vpop.permute.xlu0 %1277
      %1279 = vrot.lane.b32.xlu0 %v1230, 112
      %v1280 = vpop.permute.xlu0 %1279
      %1281 = vrot.lane.b32.xlu0 %v1234, 112
      %v1282 = vpop.permute.xlu0 %1281
      %1283 = vrot.lane.b32.xlu0 %v1238, 112
      %v1284 = vpop.permute.xlu0 %1283
      %1285 = vrot.lane.b32.xlu0 %v1242, 112
      %v1286 = vpop.permute.xlu0 %1285
      %1287 = vrot.lane.b32.xlu0 %v1246, 112
      %v1288 = vpop.permute.xlu0 %1287
      %1289 = vrot.lane.b32.xlu0 %v1250, 112
      %v1290 = vpop.permute.xlu0 %1289
      %1291 = vrot.lane.b32.xlu0 %v1254, 112
      %v1292 = vpop.permute.xlu0 %1291
      %1293 = vrot.lane.b32.xlu0 %v1258, 112
      %v1294 = vpop.permute.xlu0 %1293
      %1295 = vrot.lane.b32.xlu0 %v1262, 112
      %v1296 = vpop.permute.xlu0 %1295
      %1297 = vrot.lane.b32.xlu0 %v1266, 112
      %v1298 = vpop.permute.xlu0 %1297
      %1315 = vst.msk [vmem:[%s170 + $0x1] sm:$0x1] %vm1186, %v1268
      %1316 = vst.msk [vmem:[%s170 + $0x11] sm:$0x1] %vm1186, %v1270
      %1317 = vst.msk [vmem:[%s170 + $0x21] sm:$0x1] %vm1186, %v1272
      %1318 = vst.msk [vmem:[%s170 + $0x31] sm:$0x1] %vm1186, %v1274
      %1319 = vst.msk [vmem:[%s170 + $0x41] sm:$0x1] %vm1186, %v1276
      %1320 = vst.msk [vmem:[%s170 + $0x51] sm:$0x1] %vm1186, %v1278
      %1321 = vst.msk [vmem:[%s170 + $0x61] sm:$0x1] %vm1186, %v1280
      %1322 = vst.msk [vmem:[%s170 + $0x71] sm:$0x1] %vm1186, %v1282
      %1323 = vst.msk [vmem:[%s170 + $0x81] sm:$0x1] %vm1186, %v1284
      %1324 = vst.msk [vmem:[%s170 + $0x91] sm:$0x1] %vm1186, %v1286
      %1325 = vst.msk [vmem:[%s170 + $0xa1] sm:$0x1] %vm1186, %v1288
      %1326 = vst.msk [vmem:[%s170 + $0xb1] sm:$0x1] %vm1186, %v1290
      %1327 = vst.msk [vmem:[%s170 + $0xc1] sm:$0x1] %vm1186, %v1292
      %1328 = vst.msk [vmem:[%s170 + $0xd1] sm:$0x1] %vm1186, %v1294
      %1329 = vst.msk [vmem:[%s170 + $0xe1] sm:$0x1] %vm1186, %v1296
      %1330 = vst.msk [vmem:[%s170 + $0xf1] sm:$0x1] %vm1186, %v1298
      %1331 = vrot.lane.b32.xlu0 %v1206, 96
      %v1332 = vpop.permute.xlu0 %1331
      %1333 = vrot.lane.b32.xlu0 %v1210, 96
      %v1334 = vpop.permute.xlu0 %1333
      %1335 = vrot.lane.b32.xlu0 %v1214, 96
      %v1336 = vpop.permute.xlu0 %1335
      %1337 = vrot.lane.b32.xlu0 %v1218, 96
      %v1338 = vpop.permute.xlu0 %1337
      %1339 = vrot.lane.b32.xlu0 %v1222, 96
      %v1340 = vpop.permute.xlu0 %1339
      %1341 = vrot.lane.b32.xlu0 %v1226, 96
      %v1342 = vpop.permute.xlu0 %1341
      %1343 = vrot.lane.b32.xlu0 %v1230, 96
      %v1344 = vpop.permute.xlu0 %1343
      %1345 = vrot.lane.b32.xlu0 %v1234, 96
      %v1346 = vpop.permute.xlu0 %1345
      %1347 = vrot.lane.b32.xlu0 %v1238, 96
      %v1348 = vpop.permute.xlu0 %1347
      %1349 = vrot.lane.b32.xlu0 %v1242, 96
      %v1350 = vpop.permute.xlu0 %1349
      %1351 = vrot.lane.b32.xlu0 %v1246, 96
      %v1352 = vpop.permute.xlu0 %1351
      %1353 = vrot.lane.b32.xlu0 %v1250, 96
      %v1354 = vpop.permute.xlu0 %1353
      %1355 = vrot.lane.b32.xlu0 %v1254, 96
      %v1356 = vpop.permute.xlu0 %1355
      %1357 = vrot.lane.b32.xlu0 %v1258, 96
      %v1358 = vpop.permute.xlu0 %1357
      %1359 = vrot.lane.b32.xlu0 %v1262, 96
      %v1360 = vpop.permute.xlu0 %1359
      %1361 = vrot.lane.b32.xlu0 %v1266, 96
      %v1362 = vpop.permute.xlu0 %1361
      %1379 = vst.msk [vmem:[%s170 + $0x2] sm:$0x1] %vm1186, %v1332
      %1380 = vst.msk [vmem:[%s170 + $0x12] sm:$0x1] %vm1186, %v1334
      %1381 = vst.msk [vmem:[%s170 + $0x22] sm:$0x1] %vm1186, %v1336
      %1382 = vst.msk [vmem:[%s170 + $0x32] sm:$0x1] %vm1186, %v1338
      %1383 = vst.msk [vmem:[%s170 + $0x42] sm:$0x1] %vm1186, %v1340
      %1384 = vst.msk [vmem:[%s170 + $0x52] sm:$0x1] %vm1186, %v1342
      %1385 = vst.msk [vmem:[%s170 + $0x62] sm:$0x1] %vm1186, %v1344
      %1386 = vst.msk [vmem:[%s170 + $0x72] sm:$0x1] %vm1186, %v1346
      %1387 = vst.msk [vmem:[%s170 + $0x82] sm:$0x1] %vm1186, %v1348
      %1388 = vst.msk [vmem:[%s170 + $0x92] sm:$0x1] %vm1186, %v1350
      %1389 = vst.msk [vmem:[%s170 + $0xa2] sm:$0x1] %vm1186, %v1352
      %1390 = vst.msk [vmem:[%s170 + $0xb2] sm:$0x1] %vm1186, %v1354
      %1391 = vst.msk [vmem:[%s170 + $0xc2] sm:$0x1] %vm1186, %v1356
      %1392 = vst.msk [vmem:[%s170 + $0xd2] sm:$0x1] %vm1186, %v1358
      %1393 = vst.msk [vmem:[%s170 + $0xe2] sm:$0x1] %vm1186, %v1360
      %1394 = vst.msk [vmem:[%s170 + $0xf2] sm:$0x1] %vm1186, %v1362
      %1395 = vrot.lane.b32.xlu0 %v1206, 80
      %v1396 = vpop.permute.xlu0 %1395
      %1397 = vrot.lane.b32.xlu0 %v1210, 80
      %v1398 = vpop.permute.xlu0 %1397
      %1399 = vrot.lane.b32.xlu0 %v1214, 80
      %v1400 = vpop.permute.xlu0 %1399
      %1401 = vrot.lane.b32.xlu0 %v1218, 80
      %v1402 = vpop.permute.xlu0 %1401
      %1403 = vrot.lane.b32.xlu0 %v1222, 80
      %v1404 = vpop.permute.xlu0 %1403
      %1405 = vrot.lane.b32.xlu0 %v1226, 80
      %v1406 = vpop.permute.xlu0 %1405
      %1407 = vrot.lane.b32.xlu0 %v1230, 80
      %v1408 = vpop.permute.xlu0 %1407
      %1409 = vrot.lane.b32.xlu0 %v1234, 80
      %v1410 = vpop.permute.xlu0 %1409
      %1411 = vrot.lane.b32.xlu0 %v1238, 80
      %v1412 = vpop.permute.xlu0 %1411
      %1413 = vrot.lane.b32.xlu0 %v1242, 80
      %v1414 = vpop.permute.xlu0 %1413
      %1415 = vrot.lane.b32.xlu0 %v1246, 80
      %v1416 = vpop.permute.xlu0 %1415
      %1417 = vrot.lane.b32.xlu0 %v1250, 80
      %v1418 = vpop.permute.xlu0 %1417
      %1419 = vrot.lane.b32.xlu0 %v1254, 80
      %v1420 = vpop.permute.xlu0 %1419
      %1421 = vrot.lane.b32.xlu0 %v1258, 80
      %v1422 = vpop.permute.xlu0 %1421
      %1423 = vrot.lane.b32.xlu0 %v1262, 80
      %v1424 = vpop.permute.xlu0 %1423
      %1425 = vrot.lane.b32.xlu0 %v1266, 80
      %v1426 = vpop.permute.xlu0 %1425
      %1443 = vst.msk [vmem:[%s170 + $0x3] sm:$0x1] %vm1186, %v1396
      %1444 = vst.msk [vmem:[%s170 + $0x13] sm:$0x1] %vm1186, %v1398
      %1445 = vst.msk [vmem:[%s170 + $0x23] sm:$0x1] %vm1186, %v1400
      %1446 = vst.msk [vmem:[%s170 + $0x33] sm:$0x1] %vm1186, %v1402
      %1447 = vst.msk [vmem:[%s170 + $0x43] sm:$0x1] %vm1186, %v1404
      %1448 = vst.msk [vmem:[%s170 + $0x53] sm:$0x1] %vm1186, %v1406
      %1449 = vst.msk [vmem:[%s170 + $0x63] sm:$0x1] %vm1186, %v1408
      %1450 = vst.msk [vmem:[%s170 + $0x73] sm:$0x1] %vm1186, %v1410
      %1451 = vst.msk [vmem:[%s170 + $0x83] sm:$0x1] %vm1186, %v1412
      %1452 = vst.msk [vmem:[%s170 + $0x93] sm:$0x1] %vm1186, %v1414
      %1453 = vst.msk [vmem:[%s170 + $0xa3] sm:$0x1] %vm1186, %v1416
      %1454 = vst.msk [vmem:[%s170 + $0xb3] sm:$0x1] %vm1186, %v1418
      %1455 = vst.msk [vmem:[%s170 + $0xc3] sm:$0x1] %vm1186, %v1420
      %1456 = vst.msk [vmem:[%s170 + $0xd3] sm:$0x1] %vm1186, %v1422
      %1457 = vst.msk [vmem:[%s170 + $0xe3] sm:$0x1] %vm1186, %v1424
      %1458 = vst.msk [vmem:[%s170 + $0xf3] sm:$0x1] %vm1186, %v1426
      %1459 = vrot.lane.b32.xlu0 %v1206, 64
      %v1460 = vpop.permute.xlu0 %1459
      %1461 = vrot.lane.b32.xlu0 %v1210, 64
      %v1462 = vpop.permute.xlu0 %1461
      %1463 = vrot.lane.b32.xlu0 %v1214, 64
      %v1464 = vpop.permute.xlu0 %1463
      %1465 = vrot.lane.b32.xlu0 %v1218, 64
      %v1466 = vpop.permute.xlu0 %1465
      %1467 = vrot.lane.b32.xlu0 %v1222, 64
      %v1468 = vpop.permute.xlu0 %1467
      %1469 = vrot.lane.b32.xlu0 %v1226, 64
      %v1470 = vpop.permute.xlu0 %1469
      %1471 = vrot.lane.b32.xlu0 %v1230, 64
      %v1472 = vpop.permute.xlu0 %1471
      %1473 = vrot.lane.b32.xlu0 %v1234, 64
      %v1474 = vpop.permute.xlu0 %1473
      %1475 = vrot.lane.b32.xlu0 %v1238, 64
      %v1476 = vpop.permute.xlu0 %1475
      %1477 = vrot.lane.b32.xlu0 %v1242, 64
      %v1478 = vpop.permute.xlu0 %1477
      %1479 = vrot.lane.b32.xlu0 %v1246, 64
      %v1480 = vpop.permute.xlu0 %1479
      %1481 = vrot.lane.b32.xlu0 %v1250, 64
      %v1482 = vpop.permute.xlu0 %1481
      %1483 = vrot.lane.b32.xlu0 %v1254, 64
      %v1484 = vpop.permute.xlu0 %1483
      %1485 = vrot.lane.b32.xlu0 %v1258, 64
      %v1486 = vpop.permute.xlu0 %1485
      %1487 = vrot.lane.b32.xlu0 %v1262, 64
      %v1488 = vpop.permute.xlu0 %1487
      %1489 = vrot.lane.b32.xlu0 %v1266, 64
      %v1490 = vpop.permute.xlu0 %1489
      %1507 = vst.msk [vmem:[%s170 + $0x4] sm:$0x1] %vm1186, %v1460
      %1508 = vst.msk [vmem:[%s170 + $0x14] sm:$0x1] %vm1186, %v1462
      %1509 = vst.msk [vmem:[%s170 + $0x24] sm:$0x1] %vm1186, %v1464
      %1510 = vst.msk [vmem:[%s170 + $0x34] sm:$0x1] %vm1186, %v1466
      %1511 = vst.msk [vmem:[%s170 + $0x44] sm:$0x1] %vm1186, %v1468
      %1512 = vst.msk [vmem:[%s170 + $0x54] sm:$0x1] %vm1186, %v1470
      %1513 = vst.msk [vmem:[%s170 + $0x64] sm:$0x1] %vm1186, %v1472
      %1514 = vst.msk [vmem:[%s170 + $0x74] sm:$0x1] %vm1186, %v1474
      %1515 = vst.msk [vmem:[%s170 + $0x84] sm:$0x1] %vm1186, %v1476
      %1516 = vst.msk [vmem:[%s170 + $0x94] sm:$0x1] %vm1186, %v1478
      %1517 = vst.msk [vmem:[%s170 + $0xa4] sm:$0x1] %vm1186, %v1480
      %1518 = vst.msk [vmem:[%s170 + $0xb4] sm:$0x1] %vm1186, %v1482
      %1519 = vst.msk [vmem:[%s170 + $0xc4] sm:$0x1] %vm1186, %v1484
      %1520 = vst.msk [vmem:[%s170 + $0xd4] sm:$0x1] %vm1186, %v1486
      %1521 = vst.msk [vmem:[%s170 + $0xe4] sm:$0x1] %vm1186, %v1488
      %1522 = vst.msk [vmem:[%s170 + $0xf4] sm:$0x1] %vm1186, %v1490
      %1523 = vrot.lane.b32.xlu0 %v1206, 48
      %v1524 = vpop.permute.xlu0 %1523
      %1525 = vrot.lane.b32.xlu0 %v1210, 48
      %v1526 = vpop.permute.xlu0 %1525
      %1527 = vrot.lane.b32.xlu0 %v1214, 48
      %v1528 = vpop.permute.xlu0 %1527
      %1529 = vrot.lane.b32.xlu0 %v1218, 48
      %v1530 = vpop.permute.xlu0 %1529
      %1531 = vrot.lane.b32.xlu0 %v1222, 48
      %v1532 = vpop.permute.xlu0 %1531
      %1533 = vrot.lane.b32.xlu0 %v1226, 48
      %v1534 = vpop.permute.xlu0 %1533
      %1535 = vrot.lane.b32.xlu0 %v1230, 48
      %v1536 = vpop.permute.xlu0 %1535
      %1537 = vrot.lane.b32.xlu0 %v1234, 48
      %v1538 = vpop.permute.xlu0 %1537
      %1539 = vrot.lane.b32.xlu0 %v1238, 48
      %v1540 = vpop.permute.xlu0 %1539
      %1541 = vrot.lane.b32.xlu0 %v1242, 48
      %v1542 = vpop.permute.xlu0 %1541
      %1543 = vrot.lane.b32.xlu0 %v1246, 48
      %v1544 = vpop.permute.xlu0 %1543
      %1545 = vrot.lane.b32.xlu0 %v1250, 48
      %v1546 = vpop.permute.xlu0 %1545
      %1547 = vrot.lane.b32.xlu0 %v1254, 48
      %v1548 = vpop.permute.xlu0 %1547
      %1549 = vrot.lane.b32.xlu0 %v1258, 48
      %v1550 = vpop.permute.xlu0 %1549
      %1551 = vrot.lane.b32.xlu0 %v1262, 48
      %v1552 = vpop.permute.xlu0 %1551
      %1553 = vrot.lane.b32.xlu0 %v1266, 48
      %v1554 = vpop.permute.xlu0 %1553
      %1571 = vst.msk [vmem:[%s170 + $0x5] sm:$0x1] %vm1186, %v1524
      %1572 = vst.msk [vmem:[%s170 + $0x15] sm:$0x1] %vm1186, %v1526
      %1573 = vst.msk [vmem:[%s170 + $0x25] sm:$0x1] %vm1186, %v1528
      %1574 = vst.msk [vmem:[%s170 + $0x35] sm:$0x1] %vm1186, %v1530
      %1575 = vst.msk [vmem:[%s170 + $0x45] sm:$0x1] %vm1186, %v1532
      %1576 = vst.msk [vmem:[%s170 + $0x55] sm:$0x1] %vm1186, %v1534
      %1577 = vst.msk [vmem:[%s170 + $0x65] sm:$0x1] %vm1186, %v1536
      %1578 = vst.msk [vmem:[%s170 + $0x75] sm:$0x1] %vm1186, %v1538
      %1579 = vst.msk [vmem:[%s170 + $0x85] sm:$0x1] %vm1186, %v1540
      %1580 = vst.msk [vmem:[%s170 + $0x95] sm:$0x1] %vm1186, %v1542
      %1581 = vst.msk [vmem:[%s170 + $0xa5] sm:$0x1] %vm1186, %v1544
      %1582 = vst.msk [vmem:[%s170 + $0xb5] sm:$0x1] %vm1186, %v1546
      %1583 = vst.msk [vmem:[%s170 + $0xc5] sm:$0x1] %vm1186, %v1548
      %1584 = vst.msk [vmem:[%s170 + $0xd5] sm:$0x1] %vm1186, %v1550
      %1585 = vst.msk [vmem:[%s170 + $0xe5] sm:$0x1] %vm1186, %v1552
      %1586 = vst.msk [vmem:[%s170 + $0xf5] sm:$0x1] %vm1186, %v1554
      %1587 = vrot.lane.b32.xlu0 %v1206, 32
      %v1588 = vpop.permute.xlu0 %1587
      %1589 = vrot.lane.b32.xlu0 %v1210, 32
      %v1590 = vpop.permute.xlu0 %1589
      %1591 = vrot.lane.b32.xlu0 %v1214, 32
      %v1592 = vpop.permute.xlu0 %1591
      %1593 = vrot.lane.b32.xlu0 %v1218, 32
      %v1594 = vpop.permute.xlu0 %1593
      %1595 = vrot.lane.b32.xlu0 %v1222, 32
      %v1596 = vpop.permute.xlu0 %1595
      %1597 = vrot.lane.b32.xlu0 %v1226, 32
      %v1598 = vpop.permute.xlu0 %1597
      %1599 = vrot.lane.b32.xlu0 %v1230, 32
      %v1600 = vpop.permute.xlu0 %1599
      %1601 = vrot.lane.b32.xlu0 %v1234, 32
      %v1602 = vpop.permute.xlu0 %1601
      %1603 = vrot.lane.b32.xlu0 %v1238, 32
      %v1604 = vpop.permute.xlu0 %1603
      %1605 = vrot.lane.b32.xlu0 %v1242, 32
      %v1606 = vpop.permute.xlu0 %1605
      %1607 = vrot.lane.b32.xlu0 %v1246, 32
      %v1608 = vpop.permute.xlu0 %1607
      %1609 = vrot.lane.b32.xlu0 %v1250, 32
      %v1610 = vpop.permute.xlu0 %1609
      %1611 = vrot.lane.b32.xlu0 %v1254, 32
      %v1612 = vpop.permute.xlu0 %1611
      %1613 = vrot.lane.b32.xlu0 %v1258, 32
      %v1614 = vpop.permute.xlu0 %1613
      %1615 = vrot.lane.b32.xlu0 %v1262, 32
      %v1616 = vpop.permute.xlu0 %1615
      %1617 = vrot.lane.b32.xlu0 %v1266, 32
      %v1618 = vpop.permute.xlu0 %1617
      %1635 = vst.msk [vmem:[%s170 + $0x6] sm:$0x1] %vm1186, %v1588
      %1636 = vst.msk [vmem:[%s170 + $0x16] sm:$0x1] %vm1186, %v1590
      %1637 = vst.msk [vmem:[%s170 + $0x26] sm:$0x1] %vm1186, %v1592
      %1638 = vst.msk [vmem:[%s170 + $0x36] sm:$0x1] %vm1186, %v1594
      %1639 = vst.msk [vmem:[%s170 + $0x46] sm:$0x1] %vm1186, %v1596
      %1640 = vst.msk [vmem:[%s170 + $0x56] sm:$0x1] %vm1186, %v1598
      %1641 = vst.msk [vmem:[%s170 + $0x66] sm:$0x1] %vm1186, %v1600
      %1642 = vst.msk [vmem:[%s170 + $0x76] sm:$0x1] %vm1186, %v1602
      %1643 = vst.msk [vmem:[%s170 + $0x86] sm:$0x1] %vm1186, %v1604
      %1644 = vst.msk [vmem:[%s170 + $0x96] sm:$0x1] %vm1186, %v1606
      %1645 = vst.msk [vmem:[%s170 + $0xa6] sm:$0x1] %vm1186, %v1608
      %1646 = vst.msk [vmem:[%s170 + $0xb6] sm:$0x1] %vm1186, %v1610
      %1647 = vst.msk [vmem:[%s170 + $0xc6] sm:$0x1] %vm1186, %v1612
      %1648 = vst.msk [vmem:[%s170 + $0xd6] sm:$0x1] %vm1186, %v1614
      %1649 = vst.msk [vmem:[%s170 + $0xe6] sm:$0x1] %vm1186, %v1616
      %1650 = vst.msk [vmem:[%s170 + $0xf6] sm:$0x1] %vm1186, %v1618
      %1651 = vrot.lane.b32.xlu0 %v1206, 16
      %v1652 = vpop.permute.xlu0 %1651
      %1653 = vrot.lane.b32.xlu0 %v1210, 16
      %v1654 = vpop.permute.xlu0 %1653
      %1655 = vrot.lane.b32.xlu0 %v1214, 16
      %v1656 = vpop.permute.xlu0 %1655
      %1657 = vrot.lane.b32.xlu0 %v1218, 16
      %v1658 = vpop.permute.xlu0 %1657
      %1659 = vrot.lane.b32.xlu0 %v1222, 16
      %v1660 = vpop.permute.xlu0 %1659
      %1661 = vrot.lane.b32.xlu0 %v1226, 16
      %v1662 = vpop.permute.xlu0 %1661
      %1663 = vrot.lane.b32.xlu0 %v1230, 16
      %v1664 = vpop.permute.xlu0 %1663
      %1665 = vrot.lane.b32.xlu0 %v1234, 16
      %v1666 = vpop.permute.xlu0 %1665
      %1667 = vrot.lane.b32.xlu0 %v1238, 16
      %v1668 = vpop.permute.xlu0 %1667
      %1669 = vrot.lane.b32.xlu0 %v1242, 16
      %v1670 = vpop.permute.xlu0 %1669
      %1671 = vrot.lane.b32.xlu0 %v1246, 16
      %v1672 = vpop.permute.xlu0 %1671
      %1673 = vrot.lane.b32.xlu0 %v1250, 16
      %v1674 = vpop.permute.xlu0 %1673
      %1675 = vrot.lane.b32.xlu0 %v1254, 16
      %v1676 = vpop.permute.xlu0 %1675
      %1677 = vrot.lane.b32.xlu0 %v1258, 16
      %v1678 = vpop.permute.xlu0 %1677
      %1679 = vrot.lane.b32.xlu0 %v1262, 16
      %v1680 = vpop.permute.xlu0 %1679
      %1681 = vrot.lane.b32.xlu0 %v1266, 16
      %v1682 = vpop.permute.xlu0 %1681
      %1699 = vst.msk [vmem:[%s170 + $0x7] sm:$0x1] %vm1186, %v1652
      %1700 = vst.msk [vmem:[%s170 + $0x17] sm:$0x1] %vm1186, %v1654
      %1701 = vst.msk [vmem:[%s170 + $0x27] sm:$0x1] %vm1186, %v1656
      %1702 = vst.msk [vmem:[%s170 + $0x37] sm:$0x1] %vm1186, %v1658
      %1703 = vst.msk [vmem:[%s170 + $0x47] sm:$0x1] %vm1186, %v1660
      %1704 = vst.msk [vmem:[%s170 + $0x57] sm:$0x1] %vm1186, %v1662
      %1705 = vst.msk [vmem:[%s170 + $0x67] sm:$0x1] %vm1186, %v1664
      %1706 = vst.msk [vmem:[%s170 + $0x77] sm:$0x1] %vm1186, %v1666
      %1707 = vst.msk [vmem:[%s170 + $0x87] sm:$0x1] %vm1186, %v1668
      %1708 = vst.msk [vmem:[%s170 + $0x97] sm:$0x1] %vm1186, %v1670
      %1709 = vst.msk [vmem:[%s170 + $0xa7] sm:$0x1] %vm1186, %v1672
      %1710 = vst.msk [vmem:[%s170 + $0xb7] sm:$0x1] %vm1186, %v1674
      %1711 = vst.msk [vmem:[%s170 + $0xc7] sm:$0x1] %vm1186, %v1676
      %1712 = vst.msk [vmem:[%s170 + $0xd7] sm:$0x1] %vm1186, %v1678
      %1713 = vst.msk [vmem:[%s170 + $0xe7] sm:$0x1] %vm1186, %v1680
      %1714 = vst.msk [vmem:[%s170 + $0xf7] sm:$0x1] %vm1186, %v1682
      %v1717 = vcombine.high %v1064, %v1064
      %v1719 = vunpack.c.l.s4 1966171168
      %v1720 = vunpack.c.0.s8 %v1719
      %v1721 = vlaneseq
      %v1722 = vshrl.u32 %v1721, 7
      %v1723 = vsub.s32 %v1720, %v1722
      %v1724 = vrot.slane %v1064, %v1723
      %v1726 = vunpack.c.l.s4 1966171168
      %v1727 = vunpack.c.0.s8 %v1726
      %v1728 = vlaneseq
      %v1729 = vshrl.u32 %v1728, 7
      %v1730 = vsub.s32 %v1727, %v1729
      %v1731 = vrot.slane %v1717, %v1730
      %v1732 = vcombine.high %v1724, %v1724
      %v1733 = vcombine.high %v1731, %v1731
      %v1735 = vunpack.c.l.s4 1966171168
      %v1736 = vunpack.c.0.s8 %v1735
      %v1737 = vlaneseq
      %v1738 = vshrl.u32 %v1737, 7
      %v1739 = vsub.s32 %v1736, %v1738
      %v1740 = vrot.slane %v1724, %v1739
      %v1742 = vunpack.c.l.s4 1966171168
      %v1743 = vunpack.c.0.s8 %v1742
      %v1744 = vlaneseq
      %v1745 = vshrl.u32 %v1744, 7
      %v1746 = vsub.s32 %v1743, %v1745
      %v1747 = vrot.slane %v1731, %v1746
      %v1749 = vunpack.c.l.s4 1966171168
      %v1750 = vunpack.c.0.s8 %v1749
      %v1751 = vlaneseq
      %v1752 = vshrl.u32 %v1751, 7
      %v1753 = vsub.s32 %v1750, %v1752
      %v1754 = vrot.slane %v1732, %v1753
      %v1756 = vunpack.c.l.s4 1966171168
      %v1757 = vunpack.c.0.s8 %v1756
      %v1758 = vlaneseq
      %v1759 = vshrl.u32 %v1758, 7
      %v1760 = vsub.s32 %v1757, %v1759
      %v1761 = vrot.slane %v1733, %v1760
      %v1762 = vcombine.high %v1740, %v1740
      %v1763 = vcombine.high %v1747, %v1747
      %v1764 = vcombine.high %v1754, %v1754
      %v1765 = vcombine.high %v1761, %v1761
      %v1766 = vcombine.high %v1068, %v1068
      %v1768 = vunpack.c.l.s4 1966171168
      %v1769 = vunpack.c.0.s8 %v1768
      %v1770 = vlaneseq
      %v1771 = vshrl.u32 %v1770, 7
      %v1772 = vsub.s32 %v1769, %v1771
      %v1773 = vrot.slane %v1068, %v1772
      %v1775 = vunpack.c.l.s4 1966171168
      %v1776 = vunpack.c.0.s8 %v1775
      %v1777 = vlaneseq
      %v1778 = vshrl.u32 %v1777, 7
      %v1779 = vsub.s32 %v1776, %v1778
      %v1780 = vrot.slane %v1766, %v1779
      %v1781 = vcombine.high %v1773, %v1773
      %v1782 = vcombine.high %v1780, %v1780
      %v1784 = vunpack.c.l.s4 1966171168
      %v1785 = vunpack.c.0.s8 %v1784
      %v1786 = vlaneseq
      %v1787 = vshrl.u32 %v1786, 7
      %v1788 = vsub.s32 %v1785, %v1787
      %v1789 = vrot.slane %v1773, %v1788
      %v1791 = vunpack.c.l.s4 1966171168
      %v1792 = vunpack.c.0.s8 %v1791
      %v1793 = vlaneseq
      %v1794 = vshrl.u32 %v1793, 7
      %v1795 = vsub.s32 %v1792, %v1794
      %v1796 = vrot.slane %v1780, %v1795
      %v1798 = vunpack.c.l.s4 1966171168
      %v1799 = vunpack.c.0.s8 %v1798
      %v1800 = vlaneseq
      %v1801 = vshrl.u32 %v1800, 7
      %v1802 = vsub.s32 %v1799, %v1801
      %v1803 = vrot.slane %v1781, %v1802
      %v1805 = vunpack.c.l.s4 1966171168
      %v1806 = vunpack.c.0.s8 %v1805
      %v1807 = vlaneseq
      %v1808 = vshrl.u32 %v1807, 7
      %v1809 = vsub.s32 %v1806, %v1808
      %v1810 = vrot.slane %v1782, %v1809
      %v1811 = vcombine.high %v1789, %v1789
      %v1812 = vcombine.high %v1796, %v1796
      %v1813 = vcombine.high %v1803, %v1803
      %v1814 = vcombine.high %v1810, %v1810
      %1831 = vst.msk [vmem:[%s170 + $0x8] sm:$0x1] %vm1186, %v1740
      %1832 = vst.msk [vmem:[%s170 + $0x18] sm:$0x1] %vm1186, %v1754
      %1833 = vst.msk [vmem:[%s170 + $0x28] sm:$0x1] %vm1186, %v1762
      %1834 = vst.msk [vmem:[%s170 + $0x38] sm:$0x1] %vm1186, %v1764
      %1835 = vst.msk [vmem:[%s170 + $0x48] sm:$0x1] %vm1186, %v1747
      %1836 = vst.msk [vmem:[%s170 + $0x58] sm:$0x1] %vm1186, %v1761
      %1837 = vst.msk [vmem:[%s170 + $0x68] sm:$0x1] %vm1186, %v1763
      %1838 = vst.msk [vmem:[%s170 + $0x78] sm:$0x1] %vm1186, %v1765
      %1839 = vst.msk [vmem:[%s170 + $0x88] sm:$0x1] %vm1186, %v1789
      %1840 = vst.msk [vmem:[%s170 + $0x98] sm:$0x1] %vm1186, %v1803
      %1841 = vst.msk [vmem:[%s170 + $0xa8] sm:$0x1] %vm1186, %v1811
      %1842 = vst.msk [vmem:[%s170 + $0xb8] sm:$0x1] %vm1186, %v1813
      %1843 = vst.msk [vmem:[%s170 + $0xc8] sm:$0x1] %vm1186, %v1796
      %1844 = vst.msk [vmem:[%s170 + $0xd8] sm:$0x1] %vm1186, %v1810
      %1845 = vst.msk [vmem:[%s170 + $0xe8] sm:$0x1] %vm1186, %v1812
      %1846 = vst.msk [vmem:[%s170 + $0xf8] sm:$0x1] %vm1186, %v1814
      %v1847 = vlaneseq
      %v1848 = vshrl.u32 %v1847, 7
      %v1849 = vsub.s32 0, %v1848
      %v1850 = vrot.slane %v1740, %v1849
      %v1851 = vlaneseq
      %v1852 = vshrl.u32 %v1851, 7
      %v1853 = vsub.s32 0, %v1852
      %v1854 = vrot.slane %v1754, %v1853
      %v1855 = vlaneseq
      %v1856 = vshrl.u32 %v1855, 7
      %v1857 = vsub.s32 0, %v1856
      %v1858 = vrot.slane %v1762, %v1857
      %v1859 = vlaneseq
      %v1860 = vshrl.u32 %v1859, 7
      %v1861 = vsub.s32 0, %v1860
      %v1862 = vrot.slane %v1764, %v1861
      %v1863 = vlaneseq
      %v1864 = vshrl.u32 %v1863, 7
      %v1865 = vsub.s32 0, %v1864
      %v1866 = vrot.slane %v1747, %v1865
      %v1867 = vlaneseq
      %v1868 = vshrl.u32 %v1867, 7
      %v1869 = vsub.s32 0, %v1868
      %v1870 = vrot.slane %v1761, %v1869
      %v1871 = vlaneseq
      %v1872 = vshrl.u32 %v1871, 7
      %v1873 = vsub.s32 0, %v1872
      %v1874 = vrot.slane %v1763, %v1873
      %v1875 = vlaneseq
      %v1876 = vshrl.u32 %v1875, 7
      %v1877 = vsub.s32 0, %v1876
      %v1878 = vrot.slane %v1765, %v1877
      %v1879 = vlaneseq
      %v1880 = vshrl.u32 %v1879, 7
      %v1881 = vsub.s32 0, %v1880
      %v1882 = vrot.slane %v1789, %v1881
      %v1883 = vlaneseq
      %v1884 = vshrl.u32 %v1883, 7
      %v1885 = vsub.s32 0, %v1884
      %v1886 = vrot.slane %v1803, %v1885
      %v1887 = vlaneseq
      %v1888 = vshrl.u32 %v1887, 7
      %v1889 = vsub.s32 0, %v1888
      %v1890 = vrot.slane %v1811, %v1889
      %v1891 = vlaneseq
      %v1892 = vshrl.u32 %v1891, 7
      %v1893 = vsub.s32 0, %v1892
      %v1894 = vrot.slane %v1813, %v1893
      %v1895 = vlaneseq
      %v1896 = vshrl.u32 %v1895, 7
      %v1897 = vsub.s32 0, %v1896
      %v1898 = vrot.slane %v1796, %v1897
      %v1899 = vlaneseq
      %v1900 = vshrl.u32 %v1899, 7
      %v1901 = vsub.s32 0, %v1900
      %v1902 = vrot.slane %v1810, %v1901
      %v1903 = vlaneseq
      %v1904 = vshrl.u32 %v1903, 7
      %v1905 = vsub.s32 0, %v1904
      %v1906 = vrot.slane %v1812, %v1905
      %v1907 = vlaneseq
      %v1908 = vshrl.u32 %v1907, 7
      %v1909 = vsub.s32 0, %v1908
      %v1910 = vrot.slane %v1814, %v1909
      %1911 = vrot.lane.b32.xlu0 %v1850, 112
      %v1912 = vpop.permute.xlu0 %1911
      %1913 = vrot.lane.b32.xlu0 %v1854, 112
      %v1914 = vpop.permute.xlu0 %1913
      %1915 = vrot.lane.b32.xlu0 %v1858, 112
      %v1916 = vpop.permute.xlu0 %1915
      %1917 = vrot.lane.b32.xlu0 %v1862, 112
      %v1918 = vpop.permute.xlu0 %1917
      %1919 = vrot.lane.b32.xlu0 %v1866, 112
      %v1920 = vpop.permute.xlu0 %1919
      %1921 = vrot.lane.b32.xlu0 %v1870, 112
      %v1922 = vpop.permute.xlu0 %1921
      %1923 = vrot.lane.b32.xlu0 %v1874, 112
      %v1924 = vpop.permute.xlu0 %1923
      %1925 = vrot.lane.b32.xlu0 %v1878, 112
      %v1926 = vpop.permute.xlu0 %1925
      %1927 = vrot.lane.b32.xlu0 %v1882, 112
      %v1928 = vpop.permute.xlu0 %1927
      %1929 = vrot.lane.b32.xlu0 %v1886, 112
      %v1930 = vpop.permute.xlu0 %1929
      %1931 = vrot.lane.b32.xlu0 %v1890, 112
      %v1932 = vpop.permute.xlu0 %1931
      %1933 = vrot.lane.b32.xlu0 %v1894, 112
      %v1934 = vpop.permute.xlu0 %1933
      %1935 = vrot.lane.b32.xlu0 %v1898, 112
      %v1936 = vpop.permute.xlu0 %1935
      %1937 = vrot.lane.b32.xlu0 %v1902, 112
      %v1938 = vpop.permute.xlu0 %1937
      %1939 = vrot.lane.b32.xlu0 %v1906, 112
      %v1940 = vpop.permute.xlu0 %1939
      %1941 = vrot.lane.b32.xlu0 %v1910, 112
      %v1942 = vpop.permute.xlu0 %1941
      %1959 = vst.msk [vmem:[%s170 + $0x9] sm:$0x1] %vm1186, %v1912
      %1960 = vst.msk [vmem:[%s170 + $0x19] sm:$0x1] %vm1186, %v1914
      %1961 = vst.msk [vmem:[%s170 + $0x29] sm:$0x1] %vm1186, %v1916
      %1962 = vst.msk [vmem:[%s170 + $0x39] sm:$0x1] %vm1186, %v1918
      %1963 = vst.msk [vmem:[%s170 + $0x49] sm:$0x1] %vm1186, %v1920
      %1964 = vst.msk [vmem:[%s170 + $0x59] sm:$0x1] %vm1186, %v1922
      %1965 = vst.msk [vmem:[%s170 + $0x69] sm:$0x1] %vm1186, %v1924
      %1966 = vst.msk [vmem:[%s170 + $0x79] sm:$0x1] %vm1186, %v1926
      %1967 = vst.msk [vmem:[%s170 + $0x89] sm:$0x1] %vm1186, %v1928
      %1968 = vst.msk [vmem:[%s170 + $0x99] sm:$0x1] %vm1186, %v1930
      %1969 = vst.msk [vmem:[%s170 + $0xa9] sm:$0x1] %vm1186, %v1932
      %1970 = vst.msk [vmem:[%s170 + $0xb9] sm:$0x1] %vm1186, %v1934
      %1971 = vst.msk [vmem:[%s170 + $0xc9] sm:$0x1] %vm1186, %v1936
      %1972 = vst.msk [vmem:[%s170 + $0xd9] sm:$0x1] %vm1186, %v1938
      %1973 = vst.msk [vmem:[%s170 + $0xe9] sm:$0x1] %vm1186, %v1940
      %1974 = vst.msk [vmem:[%s170 + $0xf9] sm:$0x1] %vm1186, %v1942
      %1975 = vrot.lane.b32.xlu0 %v1850, 96
      %v1976 = vpop.permute.xlu0 %1975
      %1977 = vrot.lane.b32.xlu0 %v1854, 96
      %v1978 = vpop.permute.xlu0 %1977
      %1979 = vrot.lane.b32.xlu0 %v1858, 96
      %v1980 = vpop.permute.xlu0 %1979
      %1981 = vrot.lane.b32.xlu0 %v1862, 96
      %v1982 = vpop.permute.xlu0 %1981
      %1983 = vrot.lane.b32.xlu0 %v1866, 96
      %v1984 = vpop.permute.xlu0 %1983
      %1985 = vrot.lane.b32.xlu0 %v1870, 96
      %v1986 = vpop.permute.xlu0 %1985
      %1987 = vrot.lane.b32.xlu0 %v1874, 96
      %v1988 = vpop.permute.xlu0 %1987
      %1989 = vrot.lane.b32.xlu0 %v1878, 96
      %v1990 = vpop.permute.xlu0 %1989
      %1991 = vrot.lane.b32.xlu0 %v1882, 96
      %v1992 = vpop.permute.xlu0 %1991
      %1993 = vrot.lane.b32.xlu0 %v1886, 96
      %v1994 = vpop.permute.xlu0 %1993
      %1995 = vrot.lane.b32.xlu0 %v1890, 96
      %v1996 = vpop.permute.xlu0 %1995
      %1997 = vrot.lane.b32.xlu0 %v1894, 96
      %v1998 = vpop.permute.xlu0 %1997
      %1999 = vrot.lane.b32.xlu0 %v1898, 96
      %v2000 = vpop.permute.xlu0 %1999
      %2001 = vrot.lane.b32.xlu0 %v1902, 96
      %v2002 = vpop.permute.xlu0 %2001
      %2003 = vrot.lane.b32.xlu0 %v1906, 96
      %v2004 = vpop.permute.xlu0 %2003
      %2005 = vrot.lane.b32.xlu0 %v1910, 96
      %v2006 = vpop.permute.xlu0 %2005
      %2023 = vst.msk [vmem:[%s170 + $0xa] sm:$0x1] %vm1186, %v1976
      %2024 = vst.msk [vmem:[%s170 + $0x1a] sm:$0x1] %vm1186, %v1978
      %2025 = vst.msk [vmem:[%s170 + $0x2a] sm:$0x1] %vm1186, %v1980
      %2026 = vst.msk [vmem:[%s170 + $0x3a] sm:$0x1] %vm1186, %v1982
      %2027 = vst.msk [vmem:[%s170 + $0x4a] sm:$0x1] %vm1186, %v1984
      %2028 = vst.msk [vmem:[%s170 + $0x5a] sm:$0x1] %vm1186, %v1986
      %2029 = vst.msk [vmem:[%s170 + $0x6a] sm:$0x1] %vm1186, %v1988
      %2030 = vst.msk [vmem:[%s170 + $0x7a] sm:$0x1] %vm1186, %v1990
      %2031 = vst.msk [vmem:[%s170 + $0x8a] sm:$0x1] %vm1186, %v1992
      %2032 = vst.msk [vmem:[%s170 + $0x9a] sm:$0x1] %vm1186, %v1994
      %2033 = vst.msk [vmem:[%s170 + $0xaa] sm:$0x1] %vm1186, %v1996
      %2034 = vst.msk [vmem:[%s170 + $0xba] sm:$0x1] %vm1186, %v1998
      %2035 = vst.msk [vmem:[%s170 + $0xca] sm:$0x1] %vm1186, %v2000
      %2036 = vst.msk [vmem:[%s170 + $0xda] sm:$0x1] %vm1186, %v2002
      %2037 = vst.msk [vmem:[%s170 + $0xea] sm:$0x1] %vm1186, %v2004
      %2038 = vst.msk [vmem:[%s170 + $0xfa] sm:$0x1] %vm1186, %v2006
      %2039 = vrot.lane.b32.xlu0 %v1850, 80
      %v2040 = vpop.permute.xlu0 %2039
      %2041 = vrot.lane.b32.xlu0 %v1854, 80
      %v2042 = vpop.permute.xlu0 %2041
      %2043 = vrot.lane.b32.xlu0 %v1858, 80
      %v2044 = vpop.permute.xlu0 %2043
      %2045 = vrot.lane.b32.xlu0 %v1862, 80
      %v2046 = vpop.permute.xlu0 %2045
      %2047 = vrot.lane.b32.xlu0 %v1866, 80
      %v2048 = vpop.permute.xlu0 %2047
      %2049 = vrot.lane.b32.xlu0 %v1870, 80
      %v2050 = vpop.permute.xlu0 %2049
      %2051 = vrot.lane.b32.xlu0 %v1874, 80
      %v2052 = vpop.permute.xlu0 %2051
      %2053 = vrot.lane.b32.xlu0 %v1878, 80
      %v2054 = vpop.permute.xlu0 %2053
      %2055 = vrot.lane.b32.xlu0 %v1882, 80
      %v2056 = vpop.permute.xlu0 %2055
      %2057 = vrot.lane.b32.xlu0 %v1886, 80
      %v2058 = vpop.permute.xlu0 %2057
      %2059 = vrot.lane.b32.xlu0 %v1890, 80
      %v2060 = vpop.permute.xlu0 %2059
      %2061 = vrot.lane.b32.xlu0 %v1894, 80
      %v2062 = vpop.permute.xlu0 %2061
      %2063 = vrot.lane.b32.xlu0 %v1898, 80
      %v2064 = vpop.permute.xlu0 %2063
      %2065 = vrot.lane.b32.xlu0 %v1902, 80
      %v2066 = vpop.permute.xlu0 %2065
      %2067 = vrot.lane.b32.xlu0 %v1906, 80
      %v2068 = vpop.permute.xlu0 %2067
      %2069 = vrot.lane.b32.xlu0 %v1910, 80
      %v2070 = vpop.permute.xlu0 %2069
      %2087 = vst.msk [vmem:[%s170 + $0xb] sm:$0x1] %vm1186, %v2040
      %2088 = vst.msk [vmem:[%s170 + $0x1b] sm:$0x1] %vm1186, %v2042
      %2089 = vst.msk [vmem:[%s170 + $0x2b] sm:$0x1] %vm1186, %v2044
      %2090 = vst.msk [vmem:[%s170 + $0x3b] sm:$0x1] %vm1186, %v2046
      %2091 = vst.msk [vmem:[%s170 + $0x4b] sm:$0x1] %vm1186, %v2048
      %2092 = vst.msk [vmem:[%s170 + $0x5b] sm:$0x1] %vm1186, %v2050
      %2093 = vst.msk [vmem:[%s170 + $0x6b] sm:$0x1] %vm1186, %v2052
      %2094 = vst.msk [vmem:[%s170 + $0x7b] sm:$0x1] %vm1186, %v2054
      %2095 = vst.msk [vmem:[%s170 + $0x8b] sm:$0x1] %vm1186, %v2056
      %2096 = vst.msk [vmem:[%s170 + $0x9b] sm:$0x1] %vm1186, %v2058
      %2097 = vst.msk [vmem:[%s170 + $0xab] sm:$0x1] %vm1186, %v2060
      %2098 = vst.msk [vmem:[%s170 + $0xbb] sm:$0x1] %vm1186, %v2062
      %2099 = vst.msk [vmem:[%s170 + $0xcb] sm:$0x1] %vm1186, %v2064
      %2100 = vst.msk [vmem:[%s170 + $0xdb] sm:$0x1] %vm1186, %v2066
      %2101 = vst.msk [vmem:[%s170 + $0xeb] sm:$0x1] %vm1186, %v2068
      %2102 = vst.msk [vmem:[%s170 + $0xfb] sm:$0x1] %vm1186, %v2070
      %p2103 = scmp.lt.s32.totalorder %s14, 1
      %s2104 = scalar_select %p2103, %s14, 1
      %s2105 = smul.addr %s2104, 32
      %s2106 = smul.addr %s2105, 8
      %s2107 = scalar_lea.vmem %s3, %s2106
      // Predicated region
      $region33: #{ssegnet_forward.1} parent=31 // pred_check
        %p2108 = pneg %p100
      $region34: #{ssegnet_forward.1} parent=31 // pred_check_branch
        %2110 = sbr.rel (%p2108) target = $region36
      $region35: #{ssegnet_forward.1} parent=31 // pred_region
        _
      $region36: #{ssegnet_forward.1} parent=31 // pred_fallthru
        _
    $region32: #{ssegnet_forward.1} parent=5 // pred_fallthru
      _
    %p2111 = scmp.le.s32.totalorder 2, %s9
    // Predicated region
    $region37: #{ssegnet_forward.1} parent=5 // pred_check
      %p2112 = pneg %p2111
    $region38: #{ssegnet_forward.1} parent=5 // pred_check_branch
      %2114 = sbr.rel (%p2112) target = $region40
    $region39: #{ssegnet_forward.1} parent=5 // pred_region
      %s2115 = ssub.s32 %s9, 2
      // Predicated region
      $region41: #{ssegnet_forward.1} parent=39 // pred_check
        %p2116 = pneg %p106
      $region42: #{ssegnet_forward.1} parent=39 // pred_check_branch
        %2118 = sbr.rel (%p2116) target = $region44
      $region43: #{ssegnet_forward.1} parent=39 // pred_region
        %p2119 = scmp.lt.s32.totalorder %s15, 1
        %s2120 = scalar_select %p2119, %s15, 1
        %s2121 = smul.addr %s2120, 32
        %s2122 = smul.addr %s2121, 8
        %s2123 = scalar_lea.vmem %s3, %s2122
      $region44: #{ssegnet_forward.1} parent=39 // pred_fallthru
        _
    $region40: #{ssegnet_forward.1} parent=5 // pred_fallthru
      _
  $region6: #{ssegnet_forward.1} parent=0 // loop_footer
    %s13 = sadd.s32 1, %s9
  $region7: #{ssegnet_forward.1} parent=0 // loop_footer_branch
    %8 = sbr.rel target = $region3
  $region8: #{ssegnet_forward.1} parent=0 // loop_exit
    _

</llo_original>
